<compile_context>
chip_gen: v7x
topology: tpu7x:2x2x1
jax: 0.10.0
libtpu: 0.0.40
codegen_flags: <defaults>
</compile_context>

<pallas_src>
import functools

import jax
import jax.numpy as jnp
from jax import lax
from jax.experimental import pallas as pl
from jax.experimental.pallas import tpu as pltpu


_PARALLEL_BLOCK = 256   # target tile on the parallel (output-row) grid axis

# Contract trailing (rank) axes -> A @ B.T without materializing a transpose.
_NT_DIMS = (((1,), (1,)), ((), ()))
# Contract leading axes -> A.T @ B without materializing a transpose.
_TN_DIMS = (((0,), (0,)), ((), ()))


# --------------------------------------------------------------------------------------
# Tile / VMEM planning helpers
# --------------------------------------------------------------------------------------

def _round_up(x, m):
    return -(-x // m) * m


def _vmem_capacity_bytes():
    try:
        return int(pltpu.get_tpu_info().vmem_capacity_bytes)
    except Exception:
        return 64 << 20  # conservative: v7x per-TensorCore VMEM


def _default_reduction_block():
    # Generation-aware reduction tile: on v6e/v7x a 2048-wide f32 tile is only ~1-3us
    # of DMA, so 4096 amortizes the ~0.35us per-grid-step overhead; v5e keeps 2048.
    try:
        kind = jax.devices()[0].device_kind.lower()
    except Exception:
        kind = ""
    return 2048 if "v5" in kind else 4096


def _pick_parallel_tile(dim, multiple, target=_PARALLEL_BLOCK):
    """Parallel-axis tile.  Prefer >=2 blocks so ('parallel', ...) can shard across the
    two v7x TensorCores; a partial trailing block is fine (output rows are independent)."""
    if dim <= multiple:
        return dim
    half = _round_up(-(-dim // 2), multiple)
    return max(multiple, min(target, half))


def _pick_divisor_tile(dim, target, multiple):
    """Largest block <= target that is a multiple of `multiple` and divides dim."""
    if dim <= target:
        return dim
    hi = max(multiple, (target // multiple) * multiple)
    for cand in range(hi, 0, -multiple):
        if dim % cand == 0:
            return cand
    return dim


def _pick_reduction_tile(dim, target, multiple):
    """Reduction-axis tile.  Returns (block, padded_dim): operands are zero-padded to
    padded_dim, which is exact (padded rows/cols contribute nothing to either sum)."""
    if dim <= target:
        return dim, dim
    hi = max(multiple, (target // multiple) * multiple)
    for cand in range(hi, 0, -multiple):
        if dim % cand == 0:
            return cand, dim
    padded = _round_up(dim, multiple)
    for cand in range(hi, 0, -multiple):
        if padded % cand == 0:
            return cand, padded
    return hi, _round_up(dim, hi)


def _vmem_limit(tile_bytes):
    cap = _vmem_capacity_bytes()
    ceiling = max(32 << 20, cap - (8 << 20))
    return int(min(ceiling, max(32 << 20, tile_bytes + (8 << 20))))


def _unfused_params(bm, bn, rank, weighted, in_itemsize):
    rp = _round_up(rank, 128)
    ns = 2 if weighted else 1
    tile_bytes = (
        2 * ns * bm * bn * in_itemsize            # x (+w) tiles, double-buffered
        + (3 if weighted else 1) * bm * bn * 4    # wx / recon / w*recon f32 intermediates
        + 4 * (2 * (bm + bn) * rp                 # u and v blocks, double-buffered
               + 2 * max(bm, bn) * rp             # output block, double-buffered
               + 2 * max(bm, bn) * rp)            # f32 accumulators
    )
    return pltpu.CompilerParams(
        dimension_semantics=("parallel", "arbitrary"),
        vmem_limit_bytes=_vmem_limit(tile_bytes),
    )


def _fused_plan(M, N, R, weighted, x_itemsize, f_itemsize, bm=None):
    """Row-stripe block and VMEM working-set estimate for the fused single-pass path."""
    if bm is None:
        bm = _pick_divisor_tile(M, _PARALLEL_BLOCK, 8)
    rp = _round_up(R, 128)
    ns = 2 if weighted else 1
    f_bytes = max(int(f_itemsize), 4)
    total = (
        2 * ns * bm * N * x_itemsize                   # double-buffered x (+w) stripes
        + (ns * bm * N * 4 if x_itemsize < 4 else 0)   # f32 upcasts of the stripes
        + (4 if weighted else 1) * bm * N * 4          # wx / recon / w*recon intermediates
        + 2 * N * rp * f_bytes                         # resident v (double-buffered)
        + (2 if weighted else 1) * N * rp * 4          # v-update accumulator(s)
        + 2 * (bm + N) * rp * f_bytes                  # u_new / v_new output blocks
        + 2 * bm * rp * f_bytes                        # u block
        + (2 << 20)                                    # slack (grams, small temps)
    )
    return bm, int(total)


# --------------------------------------------------------------------------------------
# Two-pass (un-fused) kernels
# --------------------------------------------------------------------------------------

def _u_weighted_kernel(x_ref, w_ref, u_ref, v_ref, out_ref, acc_a, acc_d, *, eps):
    """u-update, weighted; grid = (M/bm [parallel], N/bn [reduction])."""
    k = pl.program_id(1)

    @pl.when(k == 0)
    def _():
        acc_a[...] = jnp.zeros_like(acc_a)
        acc_d[...] = jnp.zeros_like(acc_d)

    x = x_ref[...].astype(jnp.float32)
    w = w_ref[...].astype(jnp.float32)
    u = u_ref[...].astype(jnp.float32)
    v = v_ref[...].astype(jnp.float32)

    wx = w * x
    acc_a[...] += jnp.dot(wx, v, preferred_element_type=jnp.float32)
    recon = lax.dot_general(u, v, _NT_DIMS, preferred_element_type=jnp.float32)
    acc_d[...] += jnp.dot(w * recon, v, preferred_element_type=jnp.float32)

    @pl.when(k == pl.num_programs(1) - 1)
    def _():
        out_ref[...] = ((u * acc_a[...] + eps) / (acc_d[...] + eps)).astype(out_ref.dtype)


def _u_unweighted_kernel(x_ref, u_ref, v_ref, out_ref, acc_a, gram_v, *, eps):
    """u-update, w=None; denominator via the RxR Gram: (u @ v.T) @ v == u @ (v.T @ v)."""
    k = pl.program_id(1)

    @pl.when(k == 0)
    def _():
        acc_a[...] = jnp.zeros_like(acc_a)
        gram_v[...] = jnp.zeros_like(gram_v)

    x = x_ref[...].astype(jnp.float32)
    v = v_ref[...].astype(jnp.float32)

    acc_a[...] += jnp.dot(x, v, preferred_element_type=jnp.float32)
    gram_v[...] += lax.dot_general(v, v, _TN_DIMS, preferred_element_type=jnp.float32)

    @pl.when(k == pl.num_programs(1) - 1)
    def _():
        u = u_ref[...].astype(jnp.float32)
        den = jnp.dot(u, gram_v[...], preferred_element_type=jnp.float32)
        out_ref[...] = ((u * acc_a[...] + eps) / (den + eps)).astype(out_ref.dtype)


def _v_weighted_kernel(x_ref, w_ref, u_ref, v_ref, out_ref, acc_a, acc_d, *, eps):
    """v-update, weighted, contracting over M with x / w in native (M, N) layout;
    grid = (N/bn [parallel], M/bm [reduction]).  Leading-axis dot_general contractions
    avoid any explicit per-step transpose of the u block."""
    k = pl.program_id(1)

    @pl.when(k == 0)
    def _():
        acc_a[...] = jnp.zeros_like(acc_a)
        acc_d[...] = jnp.zeros_like(acc_d)

    x = x_ref[...].astype(jnp.float32)
    w = w_ref[...].astype(jnp.float32)
    u = u_ref[...].astype(jnp.float32)
    v = v_ref[...].astype(jnp.float32)

    wx = w * x
    acc_a[...] += lax.dot_general(wx, u, _TN_DIMS, preferred_element_type=jnp.float32)
    recon = lax.dot_general(u, v, _NT_DIMS, preferred_element_type=jnp.float32)
    acc_d[...] += lax.dot_general(w * recon, u, _TN_DIMS, preferred_element_type=jnp.float32)

    @pl.when(k == pl.num_programs(1) - 1)
    def _():
        out_ref[...] = ((v * acc_a[...] + eps) / (acc_d[...] + eps)).astype(out_ref.dtype)


def _v_unweighted_kernel(x_ref, u_ref, v_ref, out_ref, acc_a, gram_u, *, eps):
    """v-update, w=None; denominator via v @ (u.T @ u)."""
    k = pl.program_id(1)

    @pl.when(k == 0)
    def _():
        acc_a[...] = jnp.zeros_like(acc_a)
        gram_u[...] = jnp.zeros_like(gram_u)

    x = x_ref[...].astype(jnp.float32)
    u = u_ref[...].astype(jnp.float32)

    acc_a[...] += lax.dot_general(x, u, _TN_DIMS, preferred_element_type=jnp.float32)
    gram_u[...] += lax.dot_general(u, u, _TN_DIMS, preferred_element_type=jnp.float32)

    @pl.when(k == pl.num_programs(1) - 1)
    def _():
        v = v_ref[...].astype(jnp.float32)
        den = jnp.dot(v, gram_u[...], preferred_element_type=jnp.float32)
        out_ref[...] = ((v * acc_a[...] + eps) / (den + eps)).astype(out_ref.dtype)


# --------------------------------------------------------------------------------------
# Fused single-pass kernels (factor=(0,1)): stream each x/w row stripe once
# --------------------------------------------------------------------------------------

def _fused_weighted_kernel(x_ref, w_ref, u_ref, v_ref, uo_ref, vo_ref, acc_a, acc_d, *, eps):
    """Per row stripe i: compute u_new[i] from the full-width stripe, then fold the
    stripe into the v-update partial sums using u_new[i].  grid = (M/bm,), sequential."""
    i = pl.program_id(0)

    @pl.when(i == 0)
    def _():
        acc_a[...] = jnp.zeros_like(acc_a)
        acc_d[...] = jnp.zeros_like(acc_d)

    x = x_ref[...].astype(jnp.float32)   # (bm, N)
    w = w_ref[...].astype(jnp.float32)
    u = u_ref[...].astype(jnp.float32)   # (bm, R)
    v = v_ref[...].astype(jnp.float32)   # (N, R)

    wx = w * x
    a_u = jnp.dot(wx, v, preferred_element_type=jnp.float32)                     # (bm, R)
    recon = lax.dot_general(u, v, _NT_DIMS, preferred_element_type=jnp.float32)  # (bm, N)
    d_u = jnp.dot(w * recon, v, preferred_element_type=jnp.float32)              # (bm, R)
    u_new = (u * a_u + eps) / (d_u + eps)
    uo_ref[...] = u_new.astype(uo_ref.dtype)

    # v-update partial sums with the already-updated u (matches the torch loop order).
    acc_a[...] += lax.dot_general(wx, u_new, _TN_DIMS, preferred_element_type=jnp.float32)
    recon2 = lax.dot_general(u_new, v, _NT_DIMS, preferred_element_type=jnp.float32)
    acc_d[...] += lax.dot_general(w * recon2, u_new, _TN_DIMS, preferred_element_type=jnp.float32)

    @pl.when(i == pl.num_programs(0) - 1)
    def _():
        vo_ref[...] = ((v * acc_a[...] + eps) / (acc_d[...] + eps)).astype(vo_ref.dtype)


def _fused_unweighted_kernel(x_ref, u_ref, v_ref, uo_ref, vo_ref, acc_a, gram_u, gram_v, *, eps):
    """Fused path for w=None: Gram-form denominators, only two large matmuls per stripe."""
    i = pl.program_id(0)
    v = v_ref[...].astype(jnp.float32)   # (N, R)

    @pl.when(i == 0)
    def _():
        acc_a[...] = jnp.zeros_like(acc_a)
        gram_u[...] = jnp.zeros_like(gram_u)
        gram_v[...] = lax.dot_general(v, v, _TN_DIMS, preferred_element_type=jnp.float32)

    x = x_ref[...].astype(jnp.float32)   # (bm, N)
    u = u_ref[...].astype(jnp.float32)   # (bm, R)

    a_u = jnp.dot(x, v, preferred_element_type=jnp.float32)                 # (bm, R)
    d_u = jnp.dot(u, gram_v[...], preferred_element_type=jnp.float32)       # (bm, R)
    u_new = (u * a_u + eps) / (d_u + eps)
    uo_ref[...] = u_new.astype(uo_ref.dtype)

    acc_a[...] += lax.dot_general(x, u_new, _TN_DIMS, preferred_element_type=jnp.float32)
    gram_u[...] += lax.dot_general(u_new, u_new, _TN_DIMS, preferred_element_type=jnp.float32)

    @pl.when(i == pl.num_programs(0) - 1)
    def _():
        d_v = jnp.dot(v, gram_u[...], preferred_element_type=jnp.float32)
        vo_ref[...] = ((v * acc_a[...] + eps) / (d_v + eps)).astype(vo_ref.dtype)


# --------------------------------------------------------------------------------------
# Wrappers
# --------------------------------------------------------------------------------------

def mu_update_u(x, u, v, w=None, *, eps=1e-16, block_rows=None, block_cols=None):
    """u_new = (u * ((w*x) @ v) + eps) / ((w * (u @ v.T)) @ v + eps)."""
    M, N = x.shape
    R = v.shape[1]
    assert u.shape == (M, R) and v.shape == (N, R)
    weighted = w is not None
    if weighted:
        assert w.shape == (M, N)

    bm = int(block_rows) if block_rows is not None else _pick_parallel_tile(M, 8)
    if block_cols is not None:
        bn = int(block_cols)
        Np = _round_up(N, bn)
    else:
        bn, Np = _pick_reduction_tile(N, _default_reduction_block(), 128)

    v_in = v
    if Np != N:
        pad = Np - N
        x = jnp.pad(x, ((0, 0), (0, pad)))
        if weighted:
            w = jnp.pad(w, ((0, 0), (0, pad)))
        v_in = jnp.pad(v, ((0, pad), (0, 0)))

    grid = (pl.cdiv(M, bm), Np // bn)

    x_spec = pl.BlockSpec((bm, bn), lambda i, k: (i, k))
    u_spec = pl.BlockSpec((bm, R), lambda i, k: (i, 0))
    v_spec = pl.BlockSpec((bn, R), lambda i, k: (k, 0))
    out_spec = pl.BlockSpec((bm, R), lambda i, k: (i, 0))

    if weighted:
        kernel = functools.partial(_u_weighted_kernel, eps=eps)
        in_specs = [x_spec, x_spec, u_spec, v_spec]
        operands = (x, w, u, v_in)
        scratch = [pltpu.VMEM((bm, R), jnp.float32), pltpu.VMEM((bm, R), jnp.float32)]
        flops = 6 * M * Np * R
    else:
        kernel = functools.partial(_u_unweighted_kernel, eps=eps)
        in_specs = [x_spec, u_spec, v_spec]
        operands = (x, u, v_in)
        scratch = [pltpu.VMEM((bm, R), jnp.float32), pltpu.VMEM((R, R), jnp.float32)]
        flops = 2 * M * Np * R

    ns = 2 if weighted else 1
    cost = pl.CostEstimate(
        flops=int(flops), transcendentals=0,
        bytes_accessed=int(x.dtype.itemsize * ns * M * Np
                           + u.dtype.itemsize * 2 * M * R
                           + v.dtype.itemsize * pl.cdiv(M, bm) * Np * R))

    return pl.pallas_call(
        kernel,
        out_shape=jax.ShapeDtypeStruct((M, R), u.dtype),
        grid_spec=pltpu.PrefetchScalarGridSpec(
            num_scalar_prefetch=0, grid=grid,
            in_specs=in_specs, out_specs=out_spec, scratch_shapes=scratch),
        compiler_params=_unfused_params(bm, bn, R, weighted, x.dtype.itemsize),
        cost_estimate=cost,
    )(*operands)


def mu_update_v(x, u, v, w=None, *, eps=1e-16, block_rows=None, block_cols=None):
    """v_new = (v * ((w.T*x.T) @ u) + eps) / ((w.T * (v @ u.T)) @ u + eps), computed
    directly from x / w in their native (M, N) layout (no HBM transposes)."""
    M, N = x.shape
    R = u.shape[1]
    assert u.shape == (M, R) and v.shape == (N, R)
    weighted = w is not None
    if weighted:
        assert w.shape == (M, N)

    bn = int(block_cols) if block_cols is not None else _pick_parallel_tile(N, 128)
    if block_rows is not None:
        bm = int(block_rows)
        Mp = _round_up(M, bm)
    else:
        bm, Mp = _pick_reduction_tile(M, _default_reduction_block(), 8)

    u_in = u
    if Mp != M:
        pad = Mp - M
        x = jnp.pad(x, ((0, pad), (0, 0)))
        if weighted:
            w = jnp.pad(w, ((0, pad), (0, 0)))
        u_in = jnp.pad(u, ((0, pad), (0, 0)))

    grid = (pl.cdiv(N, bn), Mp // bm)   # reduction over M is the trailing axis

    x_spec = pl.BlockSpec((bm, bn), lambda j, k: (k, j))
    u_spec = pl.BlockSpec((bm, R), lambda j, k: (k, 0))
    v_spec = pl.BlockSpec((bn, R), lambda j, k: (j, 0))
    out_spec = pl.BlockSpec((bn, R), lambda j, k: (j, 0))

    if weighted:
        kernel = functools.partial(_v_weighted_kernel, eps=eps)
        in_specs = [x_spec, x_spec, u_spec, v_spec]
        operands = (x, w, u_in, v)
        scratch = [pltpu.VMEM((bn, R), jnp.float32), pltpu.VMEM((bn, R), jnp.float32)]
        flops = 6 * Mp * N * R
    else:
        kernel = functools.partial(_v_unweighted_kernel, eps=eps)
        in_specs = [x_spec, u_spec, v_spec]
        operands = (x, u_in, v)
        scratch = [pltpu.VMEM((bn, R), jnp.float32), pltpu.VMEM((R, R), jnp.float32)]
        flops = 2 * Mp * N * R

    ns = 2 if weighted else 1
    cost = pl.CostEstimate(
        flops=int(flops), transcendentals=0,
        bytes_accessed=int(x.dtype.itemsize * ns * Mp * N
                           + v.dtype.itemsize * 2 * N * R
                           + u.dtype.itemsize * pl.cdiv(N, bn) * Mp * R))

    return pl.pallas_call(
        kernel,
        out_shape=jax.ShapeDtypeStruct((N, R), v.dtype),
        grid_spec=pltpu.PrefetchScalarGridSpec(
            num_scalar_prefetch=0, grid=grid,
            in_specs=in_specs, out_specs=out_spec, scratch_shapes=scratch),
        compiler_params=_unfused_params(bm, bn, R, weighted, x.dtype.itemsize),
        cost_estimate=cost,
    )(*operands)


def fused_mu_update(x, u, v, w=None, *, eps=1e-16, block_rows=None):
    """Fused factor=(0,1) update: x and w are streamed from HBM exactly once."""
    M, N = x.shape
    R = u.shape[1]
    assert u.shape == (M, R) and v.shape == (N, R)
    weighted = w is not None
    if weighted:
        assert w.shape == (M, N)

    bm = int(block_rows) if block_rows is not None else _pick_divisor_tile(M, _PARALLEL_BLOCK, 8)
    assert M % bm == 0, "fused path requires the row block to divide M"
    grid = (M // bm,)

    x_spec = pl.BlockSpec((bm, N), lambda i: (i, 0))
    u_spec = pl.BlockSpec((bm, R), lambda i: (i, 0))
    v_spec = pl.BlockSpec((N, R), lambda i: (0, 0))
    uo_spec = pl.BlockSpec((bm, R), lambda i: (i, 0))
    vo_spec = pl.BlockSpec((N, R), lambda i: (0, 0))

    if weighted:
        kernel = functools.partial(_fused_weighted_kernel, eps=eps)
        in_specs = [x_spec, x_spec, u_spec, v_spec]
        operands = (x, w, u, v)
        scratch = [pltpu.VMEM((N, R), jnp.float32), pltpu.VMEM((N, R), jnp.float32)]
        flops = 12 * M * N * R
    else:
        kernel = functools.partial(_fused_unweighted_kernel, eps=eps)
        in_specs = [x_spec, u_spec, v_spec]
        operands = (x, u, v)
        scratch = [pltpu.VMEM((N, R), jnp.float32),
                   pltpu.VMEM((R, R), jnp.float32),
                   pltpu.VMEM((R, R), jnp.float32)]
        flops = 4 * M * N * R

    _, budget = _fused_plan(M, N, R, weighted, x.dtype.itemsize, u.dtype.itemsize, bm=bm)
    ns = 2 if weighted else 1
    cost = pl.CostEstimate(
        flops=int(flops), transcendentals=0,
        bytes_accessed=int(x.dtype.itemsize * ns * M * N
                           + u.dtype.itemsize * 2 * (M + N) * R))

    return pl.pallas_call(
        kernel,
        out_shape=(jax.ShapeDtypeStruct((M, R), u.dtype),
                   jax.ShapeDtypeStruct((N, R), v.dtype)),
        grid_spec=pltpu.PrefetchScalarGridSpec(
            num_scalar_prefetch=0, grid=grid,
            in_specs=in_specs, out_specs=(uo_spec, vo_spec), scratch_shapes=scratch),
        compiler_params=pltpu.CompilerParams(
            dimension_semantics=("arbitrary",),   # v-partials carry across row stripes
            vmem_limit_bytes=_vmem_limit(budget)),
        cost_estimate=cost,
    )(*operands)


def weighted_multiplicative_update(x, factor_matrices, w=None, *, factor=(0, 1),
                                   eps=1e-16, fused=None):
    """JAX/Pallas port of WeightedMultiplicativeUpdate.forward.

    For the default factor=(0, 1) the u- and v-updates are fused into a single pass over
    x / w whenever the per-row-stripe working set fits in VMEM; otherwise (or for other
    factor orders) it falls back to the two-kernel path.  w=None uses specialized
    unweighted kernels (no ones_like(x) is ever materialized in HBM).
    """
    u, v = factor_matrices
    factor = tuple(factor)

    if factor == (0, 1):
        if fused is None:
            weighted = w is not None
            _, budget = _fused_plan(x.shape[0], x.shape[1], u.shape[1], weighted,
                                    x.dtype.itemsize, u.dtype.itemsize)
            cap = _vmem_capacity_bytes()
            use_fused = budget <= min(int(0.6 * cap), 80 << 20)
        else:
            use_fused = bool(fused)
        if use_fused:
            return fused_mu_update(x, u, v, w, eps=eps)

    for j in factor:
        if j == 0:
            u = mu_update_u(x, u, v, w, eps=eps)
        else:
            v = mu_update_v(x, u, v, w, eps=eps)
    return u, v


# --------------------------------------------------------------------------------------
# Reference + tests
# --------------------------------------------------------------------------------------

def _reference(x, factor_matrices, w=None, *, factor=(0, 1), eps=1e-16):
    """Pure-JAX reference mirroring the PyTorch module."""
    u, v = factor_matrices
    if w is None:
        w = jnp.ones_like(x)

    def upd(x, u, v, w):
        num = u * ((w * x) @ v) + eps
        den = (w * (u @ v.T)) @ v + eps
        return num / den

    for j in factor:
        if j == 0:
            u = upd(x, u, v, w)
        else:
            v = upd(x.T, v, u, w.T)
    return u, v


if __name__ == "__main__":
    key = jax.random.PRNGKey(0)
    k1, k2, k3 = jax.random.split(key, 3)
    eps = 1e-16

    def make(k, m, n, r):
        kx, ku, kv, kw = jax.random.split(k, 4)
        x = jax.random.uniform(kx, (m, n), dtype=jnp.float32)
        u = jax.random.uniform(ku, (m, r), dtype=jnp.float32) + 0.1
        v = jax.random.uniform(kv, (n, r), dtype=jnp.float32) + 0.1
        w = jax.random.uniform(kw, (m, n), dtype=jnp.float32)
        return x, u, v, w

    def close(a, b, rtol=1e-4, atol=1e-5):
        assert jnp.allclose(a, b, rtol=rtol, atol=atol), float(jnp.max(jnp.abs(a - b)))

    # 1) Weighted forward, fused single-pass path (factor=(0, 1)).
    x, u, v, w = make(k1, 128, 64, 16)
    u_ref, v_ref = _reference(x, (u, v), w)
    uf, vf = weighted_multiplicative_update(x, (u, v), w, fused=True)
    jax.block_until_ready((uf, vf))
    close(uf, u_ref)
    close(vf, v_ref)

    # 2) Weighted forward, two-kernel fallback path.
    uu, vu = weighted_multiplicative_update(x, (u, v), w, fused=False)
    jax.block_until_ready((uu, vu))
    close(uu, u_ref)
    close(vu, v_ref)

    # 3) Unweighted (w=None): fused + fallback, Gram-based denominators.
    u_ref0, v_ref0 = _reference(x, (u, v), None)
    for mode in (True, False):
        un, vn = weighted_multiplicative_update(x, (u, v), None, fused=mode)
        jax.block_until_ready((un, vn))
        close(un, u_ref0)
        close(vn, v_ref0)

    # 4) Multi-block grids on the two-pass kernels (forced small tiles).
    x2, u2, v2, w2 = make(k2, 256, 256, 16)
    u2n = mu_update_u(x2, u2, v2, w2, block_rows=128, block_cols=128)
    v2n = mu_update_v(x2, u2, v2, w2, block_rows=128, block_cols=128)
    u2n0 = mu_update_u(x2, u2, v2, None, block_rows=128, block_cols=128)
    v2n0 = mu_update_v(x2, u2, v2, None, block_rows=128, block_cols=128)
    jax.block_until_ready((u2n, v2n, u2n0, v2n0))
    close(u2n, (u2 * ((w2 * x2) @ v2) + eps) / ((w2 * (u2 @ v2.T)) @ v2 + eps))
    close(v2n, (v2 * ((w2.T * x2.T) @ u2) + eps) / ((w2.T * (v2 @ u2.T)) @ u2 + eps))
    close(u2n0, (u2 * (x2 @ v2) + eps) / ((u2 @ v2.T) @ v2 + eps))
    close(v2n0, (v2 * (x2.T @ u2) + eps) / ((v2 @ u2.T) @ u2 + eps))

    # 5) Ragged dims: non-dividing blocks exercise the exact zero-padding on the
    #    reduction axis and a partial trailing block on the parallel axis.
    x3, u3, v3, w3 = make(k3, 96, 200, 16)
    u3n = mu_update_u(x3, u3, v3, w3, block_cols=128)   # pads N: 200 -> 256
    v3n = mu_update_v(x3, u3, v3, w3, block_rows=64)    # pads M: 96 -> 128
    jax.block_until_ready((u3n, v3n))
    close(u3n, (u3 * ((w3 * x3) @ v3) + eps) / ((w3 * (u3 @ v3.T)) @ v3 + eps))
    close(v3n, (v3 * ((w3.T * x3.T) @ u3) + eps) / ((w3.T * (v3 @ u3.T)) @ u3 + eps))

    # 6) bf16-streamed x / w (kernels upcast in VMEM, accumulate in f32).
    xb, wb = x.astype(jnp.bfloat16), w.astype(jnp.bfloat16)
    ub, vb = weighted_multiplicative_update(xb, (u, v), wb)
    jax.block_until_ready((ub, vb))
    ub_ref, vb_ref = _reference(xb.astype(jnp.float32), (u, v), wb.astype(jnp.float32))
    close(ub, ub_ref, rtol=1e-3, atol=1e-4)
    close(vb, vb_ref, rtol=1e-3, atol=1e-4)

    print("KERNEL_OK")
</pallas_src>

<mosaic_0001>
module attributes {stable_mosaic.version = 11 : i64} {
  func.func @_fused_weighted_kernel(%arg0: i32, %arg1: memref<128x64xf32, #tpu.memory_space<vmem>>, %arg2: memref<128x64xf32, #tpu.memory_space<vmem>>, %arg3: memref<128x16xf32, #tpu.memory_space<vmem>>, %arg4: memref<64x16xf32, #tpu.memory_space<vmem>>, %arg5: memref<128x16xf32, #tpu.memory_space<vmem>>, %arg6: memref<64x16xf32, #tpu.memory_space<vmem>>, %arg7: memref<64x16xf32, #tpu.memory_space<vmem>>, %arg8: memref<64x16xf32, #tpu.memory_space<vmem>>) attributes {dimension_semantics = [#tpu.dimension_semantics<arbitrary>], iteration_bounds = array<i64: 1>, scalar_prefetch = 0 : i64, scratch_operands = 2 : i64, tpu.core_type = #tpu.core_type<tc>, window_params = [{transform_indices = @transform_0, window_bounds = array<i64: 128, 64>}, {transform_indices = @transform_1, window_bounds = array<i64: 128, 64>}, {transform_indices = @transform_2, window_bounds = array<i64: 128, 16>}, {pipeline_mode = #tpu.pipeline_mode<synchronous>, transform_indices = @transform_3, window_bounds = array<i64: 64, 16>}, {transform_indices = @transform_4, window_bounds = array<i64: 128, 16>}, {pipeline_mode = #tpu.pipeline_mode<synchronous>, transform_indices = @transform_5, window_bounds = array<i64: 64, 16>}]} {
    %c0_i32 = arith.constant 0 : i32
    %0 = arith.cmpi eq, %arg0, %c0_i32 : i32
    %1 = arith.extui %0 : i1 to i32
    %c0_i32_0 = arith.constant 0 : i32
    %2 = arith.cmpi ne, %1, %c0_i32_0 : i32
    scf.if %2 {
      %cst_27 = arith.constant 0.000000e+00 : f32
      %32 = vector.broadcast %cst_27 : f32 to vector<64x16xf32>
      %c0_28 = arith.constant 0 : index
      %c0_29 = arith.constant 0 : index
      %33 = vector.load %arg7[%c0_28, %c0_29] : memref<64x16xf32, #tpu.memory_space<vmem>>, vector<64x16xf32>
      tpu.vector_store %arg7[%c0_28, %c0_29], %32 {strides = array<i32>} : memref<64x16xf32, #tpu.memory_space<vmem>>, vector<64x16xf32>,
      %cst_30 = arith.constant 0.000000e+00 : f32
      %34 = vector.broadcast %cst_30 : f32 to vector<64x16xf32>
      %c0_31 = arith.constant 0 : index
      %c0_32 = arith.constant 0 : index
      %35 = vector.load %arg8[%c0_31, %c0_32] : memref<64x16xf32, #tpu.memory_space<vmem>>, vector<64x16xf32>
      tpu.vector_store %arg8[%c0_31, %c0_32], %34 {strides = array<i32>} : memref<64x16xf32, #tpu.memory_space<vmem>>, vector<64x16xf32>,
    } else {
    }
    %c0 = arith.constant 0 : index
    %c0_1 = arith.constant 0 : index
    %3 = vector.load %arg1[%c0, %c0_1] : memref<128x64xf32, #tpu.memory_space<vmem>>, vector<128x64xf32>
    %c0_2 = arith.constant 0 : index
    %c0_3 = arith.constant 0 : index
    %4 = vector.load %arg2[%c0_2, %c0_3] : memref<128x64xf32, #tpu.memory_space<vmem>>, vector<128x64xf32>
    %c0_4 = arith.constant 0 : index
    %c0_5 = arith.constant 0 : index
    %5 = vector.load %arg3[%c0_4, %c0_5] : memref<128x16xf32, #tpu.memory_space<vmem>>, vector<128x16xf32>
    %c0_6 = arith.constant 0 : index
    %c0_7 = arith.constant 0 : index
    %6 = vector.load %arg4[%c0_6, %c0_7] : memref<64x16xf32, #tpu.memory_space<vmem>>, vector<64x16xf32>
    %7 = arith.mulf %4, %3 : vector<128x64xf32>
    %cst = arith.constant dense<0.000000e+00> : vector<128x16xf32>
    %8 = tpu.matmul %7, %6, %cst {dimension_numbers = #tpu.dot_dimension_numbers<[1], [0], [0], [1], [0, 0, 1, 1], [], []>} : vector<128x64xf32>, vector<64x16xf32>, vector<128x16xf32> -> vector<128x16xf32>
    %cst_8 = arith.constant dense<0.000000e+00> : vector<128x64xf32>
    %9 = tpu.matmul %5, %6, %cst_8 {dimension_numbers = #tpu.dot_dimension_numbers<[1], [1], [0], [0], [0, 0, 1, 0], [], []>} : vector<128x16xf32>, vector<64x16xf32>, vector<128x64xf32> -> vector<128x64xf32>
    %10 = arith.mulf %4, %9 : vector<128x64xf32>
    %cst_9 = arith.constant dense<0.000000e+00> : vector<128x16xf32>
    %11 = tpu.matmul %10, %6, %cst_9 {dimension_numbers = #tpu.dot_dimension_numbers<[1], [0], [0], [1], [0, 0, 1, 1], [], []>} : vector<128x64xf32>, vector<64x16xf32>, vector<128x16xf32> -> vector<128x16xf32>
    %12 = arith.mulf %5, %8 : vector<128x16xf32>
    %cst_10 = arith.constant 1.000000e-16 : f32
    %13 = vector.broadcast %cst_10 : f32 to vector<128x16xf32>
    %14 = arith.addf %12, %13 : vector<128x16xf32>
    %cst_11 = arith.constant 1.000000e-16 : f32
    %15 = vector.broadcast %cst_11 : f32 to vector<128x16xf32>
    %16 = arith.addf %11, %15 : vector<128x16xf32>
    %17 = arith.divf %14, %16 : vector<128x16xf32>
    %c0_12 = arith.constant 0 : index
    %c0_13 = arith.constant 0 : index
    %18 = vector.load %arg5[%c0_12, %c0_13] : memref<128x16xf32, #tpu.memory_space<vmem>>, vector<128x16xf32>
    tpu.vector_store %arg5[%c0_12, %c0_13], %17 {strides = array<i32>} : memref<128x16xf32, #tpu.memory_space<vmem>>, vector<128x16xf32>,
    %c0_14 = arith.constant 0 : index
    %c0_15 = arith.constant 0 : index
    %19 = vector.load %arg7[%c0_14, %c0_15] : memref<64x16xf32, #tpu.memory_space<vmem>>, vector<64x16xf32>
    %cst_16 = arith.constant dense<0.000000e+00> : vector<64x16xf32>
    %20 = tpu.matmul %7, %17, %cst_16 {dimension_numbers = #tpu.dot_dimension_numbers<[0], [0], [1], [1], [0, 1, 1, 1], [], []>} : vector<128x64xf32>, vector<128x16xf32>, vector<64x16xf32> -> vector<64x16xf32>
    %21 = arith.addf %19, %20 : vector<64x16xf32>
    %c0_17 = arith.constant 0 : index
    %c0_18 = arith.constant 0 : index
    %22 = vector.load %arg7[%c0_17, %c0_18] : memref<64x16xf32, #tpu.memory_space<vmem>>, vector<64x16xf32>
    tpu.vector_store %arg7[%c0_17, %c0_18], %21 {strides = array<i32>} : memref<64x16xf32, #tpu.memory_space<vmem>>, vector<64x16xf32>,
    %cst_19 = arith.constant dense<0.000000e+00> : vector<128x64xf32>
    %23 = tpu.matmul %17, %6, %cst_19 {dimension_numbers = #tpu.dot_dimension_numbers<[1], [1], [0], [0], [0, 0, 1, 0], [], []>} : vector<128x16xf32>, vector<64x16xf32>, vector<128x64xf32> -> vector<128x64xf32>
    %c0_20 = arith.constant 0 : index
    %c0_21 = arith.constant 0 : index
    %24 = vector.load %arg8[%c0_20, %c0_21] : memref<64x16xf32, #tpu.memory_space<vmem>>, vector<64x16xf32>
    %25 = arith.mulf %4, %23 : vector<128x64xf32>
    %cst_22 = arith.constant dense<0.000000e+00> : vector<64x16xf32>
    %26 = tpu.matmul %25, %17, %cst_22 {dimension_numbers = #tpu.dot_dimension_numbers<[0], [0], [1], [1], [0, 1, 1, 1], [], []>} : vector<128x64xf32>, vector<128x16xf32>, vector<64x16xf32> -> vector<64x16xf32>
    %27 = arith.addf %24, %26 : vector<64x16xf32>
    %c0_23 = arith.constant 0 : index
    %c0_24 = arith.constant 0 : index
    %28 = vector.load %arg8[%c0_23, %c0_24] : memref<64x16xf32, #tpu.memory_space<vmem>>, vector<64x16xf32>
    tpu.vector_store %arg8[%c0_23, %c0_24], %27 {strides = array<i32>} : memref<64x16xf32, #tpu.memory_space<vmem>>, vector<64x16xf32>,
    %c0_i32_25 = arith.constant 0 : i32
    %29 = arith.cmpi eq, %arg0, %c0_i32_25 : i32
    %30 = arith.extui %29 : i1 to i32
    %c0_i32_26 = arith.constant 0 : i32
    %31 = arith.cmpi ne, %30, %c0_i32_26 : i32
    scf.if %31 {
      %c0_27 = arith.constant 0 : index
      %c0_28 = arith.constant 0 : index
      %32 = vector.load %arg7[%c0_27, %c0_28] : memref<64x16xf32, #tpu.memory_space<vmem>>, vector<64x16xf32>
      %33 = arith.mulf %6, %32 : vector<64x16xf32>
      %cst_29 = arith.constant 1.000000e-16 : f32
      %34 = vector.broadcast %cst_29 : f32 to vector<64x16xf32>
      %35 = arith.addf %33, %34 : vector<64x16xf32>
      %c0_30 = arith.constant 0 : index
      %c0_31 = arith.constant 0 : index
      %36 = vector.load %arg8[%c0_30, %c0_31] : memref<64x16xf32, #tpu.memory_space<vmem>>, vector<64x16xf32>
      %cst_32 = arith.constant 1.000000e-16 : f32
      %37 = vector.broadcast %cst_32 : f32 to vector<64x16xf32>
      %38 = arith.addf %36, %37 : vector<64x16xf32>
      %39 = arith.divf %35, %38 : vector<64x16xf32>
      %c0_33 = arith.constant 0 : index
      %c0_34 = arith.constant 0 : index
      %40 = vector.load %arg6[%c0_33, %c0_34] : memref<64x16xf32, #tpu.memory_space<vmem>>, vector<64x16xf32>
      tpu.vector_store %arg6[%c0_33, %c0_34], %39 {strides = array<i32>} : memref<64x16xf32, #tpu.memory_space<vmem>>, vector<64x16xf32>,
    } else {
    }
    return
  }
  func.func @transform_0(%arg0: i32) -> (i32, i32) {
    %c0_i32 = arith.constant 0 : i32
    %c0_i32_0 = arith.constant 0 : i32
    return %arg0, %c0_i32 : i32, i32
  }
  func.func @transform_1(%arg0: i32) -> (i32, i32) {
    %c0_i32 = arith.constant 0 : i32
    %c0_i32_0 = arith.constant 0 : i32
    return %arg0, %c0_i32 : i32, i32
  }
  func.func @transform_2(%arg0: i32) -> (i32, i32) {
    %c0_i32 = arith.constant 0 : i32
    %c0_i32_0 = arith.constant 0 : i32
    return %arg0, %c0_i32 : i32, i32
  }
  func.func @transform_3(%arg0: i32) -> (i32, i32) {
    %c0_i32 = arith.constant 0 : i32
    %c0_i32_0 = arith.constant 0 : i32
    %c0_i32_1 = arith.constant 0 : i32
    return %c0_i32, %c0_i32_0 : i32, i32
  }
  func.func @transform_4(%arg0: i32) -> (i32, i32) {
    %c0_i32 = arith.constant 0 : i32
    %c0_i32_0 = arith.constant 0 : i32
    return %arg0, %c0_i32 : i32, i32
  }
  func.func @transform_5(%arg0: i32) -> (i32, i32) {
    %c0_i32 = arith.constant 0 : i32
    %c0_i32_0 = arith.constant 0 : i32
    %c0_i32_1 = arith.constant 0 : i32
    return %c0_i32, %c0_i32_0 : i32, i32
  }
}

</mosaic_0001>

<llo_original>
// kernel: tpu_custom_call.1
$region0: #{tpu_custom_call.1}
  #allocation0 [shape = 'u32[]', space=smem, size = 0x4, offset = 0x4, fixed_abs, tag = 'smem constant byte address 0x4 - core index']
  #allocation1 [shape = 'u32[144,128]{1,0:T(1,128)}', space=vmem, size = 0x12000, scoped, tag = 'internal scratch']
  #allocation2 [shape = 'f32[64,16]{1,0:T(8,128)}', space=vmem, size = 0x8000, scoped, tag = 'scratch operand']
  #allocation3 [shape = 'f32[64,16]{1,0:T(8,128)}', space=vmem, size = 0x8000, scoped, tag = 'scratch operand']
  %s0 = inlined_call_operand.vmem [shape: f32[128,64], index: 0, kind: input, shape index: {}]
  %s1 = inlined_call_operand.vmem [shape: f32[128,64], index: 1, kind: input, shape index: {}]
  %s2 = inlined_call_operand.vmem [shape: f32[128,16], index: 2, kind: input, shape index: {}]
  %s3 = inlined_call_operand.vmem [shape: f32[64,16], index: 3, kind: input, shape index: {}]
  %s4 = inlined_call_operand.vmem [shape: f32[128,16], index: 4, kind: output, shape index: {0}]
  %s5 = inlined_call_operand.vmem [shape: f32[64,16], index: 5, kind: output, shape index: {1}]
  %6 = xla_tuple %s4, %s5
  %s7 = sld [smem:[#allocation0]]
  $region42: #{tpu_custom_call.1} parent=0
    _
  %s9 = ssub.s32 1, %s7
  %s10 = scalar_select 0, %s9, %s7
  // Predicated region
  $region2: #{tpu_custom_call.1} parent=0 // pred_check
    _
  $region3: #{tpu_custom_call.1} parent=0 // pred_check_branch
    %12 = sbr.rel (0) target = $region5
  $region4: #{tpu_custom_call.1} parent=0 // pred_region
    _
  $region5: #{tpu_custom_call.1} parent=0 // pred_fallthru
    _
  // Predicated region
  $region6: #{tpu_custom_call.1} parent=0 // pred_check
    _
  $region7: #{tpu_custom_call.1} parent=0 // pred_check_branch
    %14 = sbr.rel (0) target = $region9
  $region8: #{tpu_custom_call.1} parent=0 // pred_region
    _
  $region9: #{tpu_custom_call.1} parent=0 // pred_fallthru
    _
  // Predicated region
  $region10: #{tpu_custom_call.1} parent=0 // pred_check
    _
  $region11: #{tpu_custom_call.1} parent=0 // pred_check_branch
    %16 = sbr.rel (0) target = $region13
  $region12: #{tpu_custom_call.1} parent=0 // pred_region
    _
  $region13: #{tpu_custom_call.1} parent=0 // pred_fallthru
    _
  // Predicated region
  $region14: #{tpu_custom_call.1} parent=0 // pred_check
    _
  $region15: #{tpu_custom_call.1} parent=0 // pred_check_branch
    %18 = sbr.rel (0) target = $region17
  $region16: #{tpu_custom_call.1} parent=0 // pred_region
    _
  $region17: #{tpu_custom_call.1} parent=0 // pred_fallthru
    _
  %p19 = scmp.eq.s32.totalorder 0, 0
  // Predicated region
  $region18: #{tpu_custom_call.1} parent=0 // pred_check
    %p20 = pneg %p19
  $region19: #{tpu_custom_call.1} parent=0 // pred_check_branch
    %22 = sbr.rel (%p20) target = $region21
  $region20: #{tpu_custom_call.1} parent=0 // pred_region
    %vm23 = vcmask 130048
    %24 = vst.msk [vmem:[#allocation2] sm:$0xff] %vm23, 0.0
    %25 = vst.msk [vmem:[#allocation2 + $0x8] sm:$0xff] %vm23, 0.0
    %26 = vst.msk [vmem:[#allocation2 + $0x10] sm:$0xff] %vm23, 0.0
    %27 = vst.msk [vmem:[#allocation2 + $0x18] sm:$0xff] %vm23, 0.0
    %28 = vst.msk [vmem:[#allocation2 + $0x20] sm:$0xff] %vm23, 0.0
    %29 = vst.msk [vmem:[#allocation2 + $0x28] sm:$0xff] %vm23, 0.0
    %30 = vst.msk [vmem:[#allocation2 + $0x30] sm:$0xff] %vm23, 0.0
    %31 = vst.msk [vmem:[#allocation2 + $0x38] sm:$0xff] %vm23, 0.0
    %32 = vst.msk [vmem:[#allocation3] sm:$0xff] %vm23, 0.0
    %33 = vst.msk [vmem:[#allocation3 + $0x8] sm:$0xff] %vm23, 0.0
    %34 = vst.msk [vmem:[#allocation3 + $0x10] sm:$0xff] %vm23, 0.0
    %35 = vst.msk [vmem:[#allocation3 + $0x18] sm:$0xff] %vm23, 0.0
    %36 = vst.msk [vmem:[#allocation3 + $0x20] sm:$0xff] %vm23, 0.0
    %37 = vst.msk [vmem:[#allocation3 + $0x28] sm:$0xff] %vm23, 0.0
    %38 = vst.msk [vmem:[#allocation3 + $0x30] sm:$0xff] %vm23, 0.0
    %39 = vst.msk [vmem:[#allocation3 + $0x38] sm:$0xff] %vm23, 0.0
  $region21: #{tpu_custom_call.1} parent=0 // pred_fallthru
    _
  %v40 = vld [vmem:[%s0] sm:$0xff]
  %v41 = vld [vmem:[%s0 + $0x8] sm:$0xff]
  %v42 = vld [vmem:[%s0 + $0x10] sm:$0xff]
  %v43 = vld [vmem:[%s0 + $0x18] sm:$0xff]
  %v44 = vld [vmem:[%s0 + $0x20] sm:$0xff]
  %v45 = vld [vmem:[%s0 + $0x28] sm:$0xff]
  %v46 = vld [vmem:[%s0 + $0x30] sm:$0xff]
  %v47 = vld [vmem:[%s0 + $0x38] sm:$0xff]
  %v48 = vld [vmem:[%s0 + $0x40] sm:$0xff]
  %v49 = vld [vmem:[%s0 + $0x48] sm:$0xff]
  %v50 = vld [vmem:[%s0 + $0x50] sm:$0xff]
  %v51 = vld [vmem:[%s0 + $0x58] sm:$0xff]
  %v52 = vld [vmem:[%s0 + $0x60] sm:$0xff]
  %v53 = vld [vmem:[%s0 + $0x68] sm:$0xff]
  %v54 = vld [vmem:[%s0 + $0x70] sm:$0xff]
  %v55 = vld [vmem:[%s0 + $0x78] sm:$0xff]
  %v56 = vld [vmem:[%s1] sm:$0xff]
  %v57 = vld [vmem:[%s1 + $0x8] sm:$0xff]
  %v58 = vld [vmem:[%s1 + $0x10] sm:$0xff]
  %v59 = vld [vmem:[%s1 + $0x18] sm:$0xff]
  %v60 = vld [vmem:[%s1 + $0x20] sm:$0xff]
  %v61 = vld [vmem:[%s1 + $0x28] sm:$0xff]
  %v62 = vld [vmem:[%s1 + $0x30] sm:$0xff]
  %v63 = vld [vmem:[%s1 + $0x38] sm:$0xff]
  %v64 = vld [vmem:[%s1 + $0x40] sm:$0xff]
  %v65 = vld [vmem:[%s1 + $0x48] sm:$0xff]
  %v66 = vld [vmem:[%s1 + $0x50] sm:$0xff]
  %v67 = vld [vmem:[%s1 + $0x58] sm:$0xff]
  %v68 = vld [vmem:[%s1 + $0x60] sm:$0xff]
  %v69 = vld [vmem:[%s1 + $0x68] sm:$0xff]
  %v70 = vld [vmem:[%s1 + $0x70] sm:$0xff]
  %v71 = vld [vmem:[%s1 + $0x78] sm:$0xff]
  %v72 = vld [vmem:[%s2] sm:$0xff]
  %v73 = vld [vmem:[%s2 + $0x8] sm:$0xff]
  %v74 = vld [vmem:[%s2 + $0x10] sm:$0xff]
  %v75 = vld [vmem:[%s2 + $0x18] sm:$0xff]
  %v76 = vld [vmem:[%s2 + $0x20] sm:$0xff]
  %v77 = vld [vmem:[%s2 + $0x28] sm:$0xff]
  %v78 = vld [vmem:[%s2 + $0x30] sm:$0xff]
  %v79 = vld [vmem:[%s2 + $0x38] sm:$0xff]
  %v80 = vld [vmem:[%s2 + $0x40] sm:$0xff]
  %v81 = vld [vmem:[%s2 + $0x48] sm:$0xff]
  %v82 = vld [vmem:[%s2 + $0x50] sm:$0xff]
  %v83 = vld [vmem:[%s2 + $0x58] sm:$0xff]
  %v84 = vld [vmem:[%s2 + $0x60] sm:$0xff]
  %v85 = vld [vmem:[%s2 + $0x68] sm:$0xff]
  %v86 = vld [vmem:[%s2 + $0x70] sm:$0xff]
  %v87 = vld [vmem:[%s2 + $0x78] sm:$0xff]
  %v88 = vld [vmem:[%s3] sm:$0xff]
  %v89 = vld [vmem:[%s3 + $0x8] sm:$0xff]
  %v90 = vld [vmem:[%s3 + $0x10] sm:$0xff]
  %v91 = vld [vmem:[%s3 + $0x18] sm:$0xff]
  %v92 = vld [vmem:[%s3 + $0x20] sm:$0xff]
  %v93 = vld [vmem:[%s3 + $0x28] sm:$0xff]
  %v94 = vld [vmem:[%s3 + $0x30] sm:$0xff]
  %v95 = vld [vmem:[%s3 + $0x38] sm:$0xff]
  %v96 = vmul.f32 %v56, %v40
  %v97 = vmul.f32 %v57, %v41
  %v98 = vmul.f32 %v58, %v42
  %v99 = vmul.f32 %v59, %v43
  %v100 = vmul.f32 %v60, %v44
  %v101 = vmul.f32 %v61, %v45
  %v102 = vmul.f32 %v62, %v46
  %v103 = vmul.f32 %v63, %v47
  %v104 = vmul.f32 %v64, %v48
  %v105 = vmul.f32 %v65, %v49
  %v106 = vmul.f32 %v66, %v50
  %v107 = vmul.f32 %v67, %v51
  %v108 = vmul.f32 %v68, %v52
  %v109 = vmul.f32 %v69, %v53
  %v110 = vmul.f32 %v70, %v54
  %v111 = vmul.f32 %v71, %v55
  %vm112 = vcmask 523264
  %v114 = vsel %vm112, %v96, 0
  %v117 = vsel %vm112, %v97, 0
  %v120 = vsel %vm112, %v98, 0
  %v123 = vsel %vm112, %v99, 0
  %v126 = vsel %vm112, %v100, 0
  %v129 = vsel %vm112, %v101, 0
  %v132 = vsel %vm112, %v102, 0
  %v135 = vsel %vm112, %v103, 0
  %v138 = vsel %vm112, %v104, 0
  %v141 = vsel %vm112, %v105, 0
  %v144 = vsel %vm112, %v106, 0
  %v147 = vsel %vm112, %v107, 0
  %v150 = vsel %vm112, %v108, 0
  %v153 = vsel %vm112, %v109, 0
  %v156 = vsel %vm112, %v110, 0
  %v159 = vsel %vm112, %v111, 0
  %161 = vmatprep.subr.mxu0 0.0
  %162 = vmatpush1.msra.mxu0 %v88
  %163 = vmatprep.subr.mxu0 0.0
  %164 = vmatpush1.msra.mxu0 %v89
  %165 = vmatprep.subr.mxu0 0.0
  %166 = vmatpush1.msra.mxu0 %v90
  %167 = vmatprep.subr.mxu0 0.0
  %168 = vmatpush1.msra.mxu0 %v91
  %169 = vmatprep.subr.mxu0 0.0
  %170 = vmatpush1.msra.mxu0 %v92
  %171 = vmatprep.subr.mxu0 0.0
  %172 = vmatpush1.msra.mxu0 %v93
  %173 = vmatprep.subr.mxu0 0.0
  %174 = vmatpush1.msra.mxu0 %v94
  %175 = vmatprep.subr.mxu0 0.0
  %176 = vmatpush1.msra.mxu0 %v95
  %177 = vmatprep.subr.mxu0 0.0
  %178 = vmatpush1.msra.mxu0 0.0
  %179 = vmatprep.subr.mxu0 0.0
  %180 = vmatpush1.msra.mxu0 0.0
  %181 = vmatprep.subr.mxu0 0.0
  %182 = vmatpush1.msra.mxu0 0.0
  %183 = vmatprep.subr.mxu0 0.0
  %184 = vmatpush1.msra.mxu0 0.0
  %185 = vmatprep.subr.mxu0 0.0
  %186 = vmatpush1.msra.mxu0 0.0
  %187 = vmatprep.subr.mxu0 0.0
  %188 = vmatpush1.msra.mxu0 0.0
  %189 = vmatprep.subr.mxu0 0.0
  %190 = vmatpush1.msra.mxu0 0.0
  %191 = vmatprep.subr.mxu0 0.0
  %192 = vmatpush1.msra.mxu0 0.0
  %193 = vmatprep.subr.mxu0 0.0
  %194 = vmatpush1.msra.mxu0 0.0
  %195 = vmatprep.subr.mxu0 0.0
  %196 = vmatpush1.msra.mxu0 0.0
  %197 = vmatprep.subr.mxu0 0.0
  %198 = vmatpush1.msra.mxu0 0.0
  %199 = vmatprep.subr.mxu0 0.0
  %200 = vmatpush1.msra.mxu0 0.0
  %201 = vmatprep.subr.mxu0 0.0
  %202 = vmatpush1.msra.mxu0 0.0
  %203 = vmatprep.subr.mxu0 0.0
  %204 = vmatpush1.msra.mxu0 0.0
  %205 = vmatprep.subr.mxu0 0.0
  %206 = vmatpush1.msra.mxu0 0.0
  %207 = vmatprep.subr.mxu0 0.0
  %208 = vmatpush1.msra.mxu0 0.0
  %209 = vmatprep.subr.mxu0 0.0
  %210 = vmatpush1.msra.mxu0 0.0
  %211 = vmatprep.subr.mxu0 0.0
  %212 = vmatpush1.msra.mxu0 0.0
  %213 = vmatprep.subr.mxu0 0.0
  %214 = vmatpush1.msra.mxu0 0.0
  %215 = vmatprep.subr.mxu0 0.0
  %216 = vmatpush1.msra.mxu0 0.0
  %217 = vmatprep.subr.mxu0 0.0
  %218 = vmatpush1.msra.mxu0 0.0
  %219 = vmatprep.subr.mxu0 0.0
  %220 = vmatpush1.msra.mxu0 0.0
  %221 = vmatprep.subr.mxu0 0.0
  %222 = vmatpush1.msra.mxu0 0.0
  %223 = vmatprep.subr.mxu0 0.0
  %224 = vmatpush1.msra.mxu0 0.0
  %225 = vmatprep.mubr.f32.mxu0 0.0
  %226 = vmatmul.mubr.f32.gmra.mrb[0].mxu0 %v114
  %v227 = vpop.f32.mrb[0].mxu0
  %v228 = vadd.f32 0.0, %v227
  %v229 = vpop.f32.mrb[0].mxu0
  %230 = vmatprep.mubr.f32.mxu0 0.0
  %231 = vmatmul.mubr.f32.gmra.mrb[0].mxu0 %v117
  %v232 = vpop.f32.mrb[0].mxu0
  %v233 = vadd.f32 0.0, %v232
  %v234 = vpop.f32.mrb[0].mxu0
  %235 = vmatprep.mubr.f32.mxu0 0.0
  %236 = vmatmul.mubr.f32.gmra.mrb[0].mxu0 %v120
  %v237 = vpop.f32.mrb[0].mxu0
  %v238 = vadd.f32 0.0, %v237
  %v239 = vpop.f32.mrb[0].mxu0
  %240 = vmatprep.mubr.f32.mxu0 0.0
  %241 = vmatmul.mubr.f32.gmra.mrb[0].mxu0 %v123
  %v242 = vpop.f32.mrb[0].mxu0
  %v243 = vadd.f32 0.0, %v242
  %v244 = vpop.f32.mrb[0].mxu0
  %245 = vmatprep.mubr.f32.mxu0 0.0
  %246 = vmatmul.mubr.f32.gmra.mrb[0].mxu0 %v126
  %v247 = vpop.f32.mrb[0].mxu0
  %v248 = vadd.f32 0.0, %v247
  %v249 = vpop.f32.mrb[0].mxu0
  %250 = vmatprep.mubr.f32.mxu0 0.0
  %251 = vmatmul.mubr.f32.gmra.mrb[0].mxu0 %v129
  %v252 = vpop.f32.mrb[0].mxu0
  %v253 = vadd.f32 0.0, %v252
  %v254 = vpop.f32.mrb[0].mxu0
  %255 = vmatprep.mubr.f32.mxu0 0.0
  %256 = vmatmul.mubr.f32.gmra.mrb[0].mxu0 %v132
  %v257 = vpop.f32.mrb[0].mxu0
  %v258 = vadd.f32 0.0, %v257
  %v259 = vpop.f32.mrb[0].mxu0
  %260 = vmatprep.mubr.f32.mxu0 0.0
  %261 = vmatmul.mubr.f32.gmra.mrb[0].mxu0 %v135
  %v262 = vpop.f32.mrb[0].mxu0
  %v263 = vadd.f32 0.0, %v262
  %v264 = vpop.f32.mrb[0].mxu0
  %265 = vmatprep.mubr.f32.mxu0 0.0
  %266 = vmatmul.mubr.f32.gmra.mrb[0].mxu0 %v138
  %v267 = vpop.f32.mrb[0].mxu0
  %v268 = vadd.f32 0.0, %v267
  %v269 = vpop.f32.mrb[0].mxu0
  %270 = vmatprep.mubr.f32.mxu0 0.0
  %271 = vmatmul.mubr.f32.gmra.mrb[0].mxu0 %v141
  %v272 = vpop.f32.mrb[0].mxu0
  %v273 = vadd.f32 0.0, %v272
  %v274 = vpop.f32.mrb[0].mxu0
  %275 = vmatprep.mubr.f32.mxu0 0.0
  %276 = vmatmul.mubr.f32.gmra.mrb[0].mxu0 %v144
  %v277 = vpop.f32.mrb[0].mxu0
  %v278 = vadd.f32 0.0, %v277
  %v279 = vpop.f32.mrb[0].mxu0
  %280 = vmatprep.mubr.f32.mxu0 0.0
  %281 = vmatmul.mubr.f32.gmra.mrb[0].mxu0 %v147
  %v282 = vpop.f32.mrb[0].mxu0
  %v283 = vadd.f32 0.0, %v282
  %v284 = vpop.f32.mrb[0].mxu0
  %285 = vmatprep.mubr.f32.mxu0 0.0
  %286 = vmatmul.mubr.f32.gmra.mrb[0].mxu0 %v150
  %v287 = vpop.f32.mrb[0].mxu0
  %v288 = vadd.f32 0.0, %v287
  %v289 = vpop.f32.mrb[0].mxu0
  %290 = vmatprep.mubr.f32.mxu0 0.0
  %291 = vmatmul.mubr.f32.gmra.mrb[0].mxu0 %v153
  %v292 = vpop.f32.mrb[0].mxu0
  %v293 = vadd.f32 0.0, %v292
  %v294 = vpop.f32.mrb[0].mxu0
  %295 = vmatprep.mubr.f32.mxu0 0.0
  %296 = vmatmul.mubr.f32.gmra.mrb[0].mxu0 %v156
  %v297 = vpop.f32.mrb[0].mxu0
  %v298 = vadd.f32 0.0, %v297
  %v299 = vpop.f32.mrb[0].mxu0
  %300 = vmatprep.mubr.f32.mxu0 0.0
  %301 = vmatmul.mubr.f32.gmra.mrb[0].mxu0 %v159
  %v302 = vpop.f32.mrb[0].mxu0
  %v303 = vadd.f32 0.0, %v302
  %v304 = vpop.f32.mrb[0].mxu0
  %305 = vdwg.mxu0
  %vm306 = vcmask 130048
  %v308 = vsel %vm306, %v72, 0
  %v311 = vsel %vm306, %v73, 0
  %v314 = vsel %vm306, %v74, 0
  %v317 = vsel %vm306, %v75, 0
  %v320 = vsel %vm306, %v76, 0
  %v323 = vsel %vm306, %v77, 0
  %v326 = vsel %vm306, %v78, 0
  %v329 = vsel %vm306, %v79, 0
  %v332 = vsel %vm306, %v80, 0
  %v335 = vsel %vm306, %v81, 0
  %v338 = vsel %vm306, %v82, 0
  %v341 = vsel %vm306, %v83, 0
  %v344 = vsel %vm306, %v84, 0
  %v347 = vsel %vm306, %v85, 0
  %v350 = vsel %vm306, %v86, 0
  %v353 = vsel %vm306, %v87, 0
  %v356 = vsel %vm306, %v88, 0
  %v359 = vsel %vm306, %v89, 0
  %v362 = vsel %vm306, %v90, 0
  %v365 = vsel %vm306, %v91, 0
  %v368 = vsel %vm306, %v92, 0
  %v371 = vsel %vm306, %v93, 0
  %v374 = vsel %vm306, %v94, 0
  %v377 = vsel %vm306, %v95, 0
  %379 = vmatprep.subr.mxu0 0.0
  %380 = vmatpush1.xpose.msra.mxu0 %v356
  %381 = vmatprep.subr.mxu0 0.0
  %382 = vmatpush1.xpose.msra.mxu0 %v359
  %383 = vmatprep.subr.mxu0 0.0
  %384 = vmatpush1.xpose.msra.mxu0 %v362
  %385 = vmatprep.subr.mxu0 0.0
  %386 = vmatpush1.xpose.msra.mxu0 %v365
  %387 = vmatprep.subr.mxu0 0.0
  %388 = vmatpush1.xpose.msra.mxu0 %v368
  %389 = vmatprep.subr.mxu0 0.0
  %390 = vmatpush1.xpose.msra.mxu0 %v371
  %391 = vmatprep.subr.mxu0 0.0
  %392 = vmatpush1.xpose.msra.mxu0 %v374
  %393 = vmatprep.subr.mxu0 0.0
  %394 = vmatpush1.xpose.msra.mxu0 %v377
  %395 = vmatprep.subr.mxu0 0.0
  %396 = vmatpush1.xpose.msra.mxu0 0.0
  %397 = vmatprep.subr.mxu0 0.0
  %398 = vmatpush1.xpose.msra.mxu0 0.0
  %399 = vmatprep.subr.mxu0 0.0
  %400 = vmatpush1.xpose.msra.mxu0 0.0
  %401 = vmatprep.subr.mxu0 0.0
  %402 = vmatpush1.xpose.msra.mxu0 0.0
  %403 = vmatprep.subr.mxu0 0.0
  %404 = vmatpush1.xpose.msra.mxu0 0.0
  %405 = vmatprep.subr.mxu0 0.0
  %406 = vmatpush1.xpose.msra.mxu0 0.0
  %407 = vmatprep.subr.mxu0 0.0
  %408 = vmatpush1.xpose.msra.mxu0 0.0
  %409 = vmatprep.subr.mxu0 0.0
  %410 = vmatpush1.xpose.msra.mxu0 0.0
  %411 = vmatprep.subr.mxu0 0.0
  %412 = vmatpush1.xpose.msra.mxu0 0.0
  %413 = vmatprep.subr.mxu0 0.0
  %414 = vmatpush1.xpose.msra.mxu0 0.0
  %415 = vmatprep.subr.mxu0 0.0
  %416 = vmatpush1.xpose.msra.mxu0 0.0
  %417 = vmatprep.subr.mxu0 0.0
  %418 = vmatpush1.xpose.msra.mxu0 0.0
  %419 = vmatprep.subr.mxu0 0.0
  %420 = vmatpush1.xpose.msra.mxu0 0.0
  %421 = vmatprep.subr.mxu0 0.0
  %422 = vmatpush1.xpose.msra.mxu0 0.0
  %423 = vmatprep.subr.mxu0 0.0
  %424 = vmatpush1.xpose.msra.mxu0 0.0
  %425 = vmatprep.subr.mxu0 0.0
  %426 = vmatpush1.xpose.msra.mxu0 0.0
  %427 = vmatprep.subr.mxu0 0.0
  %428 = vmatpush1.xpose.msra.mxu0 0.0
  %429 = vmatprep.subr.mxu0 0.0
  %430 = vmatpush1.xpose.msra.mxu0 0.0
  %431 = vmatprep.subr.mxu0 0.0
  %432 = vmatpush1.xpose.msra.mxu0 0.0
  %433 = vmatprep.subr.mxu0 0.0
  %434 = vmatpush1.xpose.msra.mxu0 0.0
  %435 = vmatprep.subr.mxu0 0.0
  %436 = vmatpush1.xpose.msra.mxu0 0.0
  %437 = vmatprep.subr.mxu0 0.0
  %438 = vmatpush1.xpose.msra.mxu0 0.0
  %439 = vmatprep.subr.mxu0 0.0
  %440 = vmatpush1.xpose.msra.mxu0 0.0
  %441 = vmatprep.subr.mxu0 0.0
  %442 = vmatpush1.xpose.msra.mxu0 0.0
  %443 = vmatprep.mubr.f32.mxu0 0.0
  %444 = vmatmul.mubr.f32.gmra.mrb[0].mxu0 %v308
  %v445 = vpop.f32.mrb[0].mxu0
  %v446 = vadd.f32 0.0, %v445
  %v447 = vpop.f32.mrb[0].mxu0
  %448 = vmatprep.mubr.f32.mxu0 0.0
  %449 = vmatmul.mubr.f32.gmra.mrb[0].mxu0 %v311
  %v450 = vpop.f32.mrb[0].mxu0
  %v451 = vadd.f32 0.0, %v450
  %v452 = vpop.f32.mrb[0].mxu0
  %453 = vmatprep.mubr.f32.mxu0 0.0
  %454 = vmatmul.mubr.f32.gmra.mrb[0].mxu0 %v314
  %v455 = vpop.f32.mrb[0].mxu0
  %v456 = vadd.f32 0.0, %v455
  %v457 = vpop.f32.mrb[0].mxu0
  %458 = vmatprep.mubr.f32.mxu0 0.0
  %459 = vmatmul.mubr.f32.gmra.mrb[0].mxu0 %v317
  %v460 = vpop.f32.mrb[0].mxu0
  %v461 = vadd.f32 0.0, %v460
  %v462 = vpop.f32.mrb[0].mxu0
  %463 = vmatprep.mubr.f32.mxu0 0.0
  %464 = vmatmul.mubr.f32.gmra.mrb[0].mxu0 %v320
  %v465 = vpop.f32.mrb[0].mxu0
  %v466 = vadd.f32 0.0, %v465
  %v467 = vpop.f32.mrb[0].mxu0
  %468 = vmatprep.mubr.f32.mxu0 0.0
  %469 = vmatmul.mubr.f32.gmra.mrb[0].mxu0 %v323
  %v470 = vpop.f32.mrb[0].mxu0
  %v471 = vadd.f32 0.0, %v470
  %v472 = vpop.f32.mrb[0].mxu0
  %473 = vmatprep.mubr.f32.mxu0 0.0
  %474 = vmatmul.mubr.f32.gmra.mrb[0].mxu0 %v326
  %v475 = vpop.f32.mrb[0].mxu0
  %v476 = vadd.f32 0.0, %v475
  %v477 = vpop.f32.mrb[0].mxu0
  %478 = vmatprep.mubr.f32.mxu0 0.0
  %479 = vmatmul.mubr.f32.gmra.mrb[0].mxu0 %v329
  %v480 = vpop.f32.mrb[0].mxu0
  %v481 = vadd.f32 0.0, %v480
  %v482 = vpop.f32.mrb[0].mxu0
  %483 = vmatprep.mubr.f32.mxu0 0.0
  %484 = vmatmul.mubr.f32.gmra.mrb[0].mxu0 %v332
  %v485 = vpop.f32.mrb[0].mxu0
  %v486 = vadd.f32 0.0, %v485
  %v487 = vpop.f32.mrb[0].mxu0
  %488 = vmatprep.mubr.f32.mxu0 0.0
  %489 = vmatmul.mubr.f32.gmra.mrb[0].mxu0 %v335
  %v490 = vpop.f32.mrb[0].mxu0
  %v491 = vadd.f32 0.0, %v490
  %v492 = vpop.f32.mrb[0].mxu0
  %493 = vmatprep.mubr.f32.mxu0 0.0
  %494 = vmatmul.mubr.f32.gmra.mrb[0].mxu0 %v338
  %v495 = vpop.f32.mrb[0].mxu0
  %v496 = vadd.f32 0.0, %v495
  %v497 = vpop.f32.mrb[0].mxu0
  %498 = vmatprep.mubr.f32.mxu0 0.0
  %499 = vmatmul.mubr.f32.gmra.mrb[0].mxu0 %v341
  %v500 = vpop.f32.mrb[0].mxu0
  %v501 = vadd.f32 0.0, %v500
  %v502 = vpop.f32.mrb[0].mxu0
  %503 = vmatprep.mubr.f32.mxu0 0.0
  %504 = vmatmul.mubr.f32.gmra.mrb[0].mxu0 %v344
  %v505 = vpop.f32.mrb[0].mxu0
  %v506 = vadd.f32 0.0, %v505
  %v507 = vpop.f32.mrb[0].mxu0
  %508 = vmatprep.mubr.f32.mxu0 0.0
  %509 = vmatmul.mubr.f32.gmra.mrb[0].mxu0 %v347
  %v510 = vpop.f32.mrb[0].mxu0
  %v511 = vadd.f32 0.0, %v510
  %v512 = vpop.f32.mrb[0].mxu0
  %513 = vmatprep.mubr.f32.mxu0 0.0
  %514 = vmatmul.mubr.f32.gmra.mrb[0].mxu0 %v350
  %v515 = vpop.f32.mrb[0].mxu0
  %v516 = vadd.f32 0.0, %v515
  %v517 = vpop.f32.mrb[0].mxu0
  %518 = vmatprep.mubr.f32.mxu0 0.0
  %519 = vmatmul.mubr.f32.gmra.mrb[0].mxu0 %v353
  %v520 = vpop.f32.mrb[0].mxu0
  %v521 = vadd.f32 0.0, %v520
  %v522 = vpop.f32.mrb[0].mxu0
  %523 = vdwg.mxu0
  %v524 = vmul.f32 %v56, %v446
  %v525 = vmul.f32 %v57, %v451
  %v526 = vmul.f32 %v58, %v456
  %v527 = vmul.f32 %v59, %v461
  %v528 = vmul.f32 %v60, %v466
  %v529 = vmul.f32 %v61, %v471
  %v530 = vmul.f32 %v62, %v476
  %v531 = vmul.f32 %v63, %v481
  %v532 = vmul.f32 %v64, %v486
  %v533 = vmul.f32 %v65, %v491
  %v534 = vmul.f32 %v66, %v496
  %v535 = vmul.f32 %v67, %v501
  %v536 = vmul.f32 %v68, %v506
  %v537 = vmul.f32 %v69, %v511
  %v538 = vmul.f32 %v70, %v516
  %v539 = vmul.f32 %v71, %v521
  %v540 = vmul.f32 %v72, %v228
  %v541 = vmul.f32 %v73, %v233
  %v542 = vmul.f32 %v74, %v238
  %v543 = vmul.f32 %v75, %v243
  %v544 = vmul.f32 %v76, %v248
  %v545 = vmul.f32 %v77, %v253
  %v546 = vmul.f32 %v78, %v258
  %v547 = vmul.f32 %v79, %v263
  %v548 = vmul.f32 %v80, %v268
  %v549 = vmul.f32 %v81, %v273
  %v550 = vmul.f32 %v82, %v278
  %v551 = vmul.f32 %v83, %v283
  %v552 = vmul.f32 %v84, %v288
  %v553 = vmul.f32 %v85, %v293
  %v554 = vmul.f32 %v86, %v298
  %v555 = vmul.f32 %v87, %v303
  %v556 = vadd.f32 %v540, 1e-16
  %v557 = vadd.f32 %v541, 1e-16
  %v558 = vadd.f32 %v542, 1e-16
  %v559 = vadd.f32 %v543, 1e-16
  %v560 = vadd.f32 %v544, 1e-16
  %v561 = vadd.f32 %v545, 1e-16
  %v562 = vadd.f32 %v546, 1e-16
  %v563 = vadd.f32 %v547, 1e-16
  %v564 = vadd.f32 %v548, 1e-16
  %v565 = vadd.f32 %v549, 1e-16
  %v566 = vadd.f32 %v550, 1e-16
  %v567 = vadd.f32 %v551, 1e-16
  %v568 = vadd.f32 %v552, 1e-16
  %v569 = vadd.f32 %v553, 1e-16
  %v570 = vadd.f32 %v554, 1e-16
  %v571 = vadd.f32 %v555, 1e-16
  %v573 = vsel %vm112, %v524, 0
  %v576 = vsel %vm112, %v525, 0
  %v579 = vsel %vm112, %v526, 0
  %v582 = vsel %vm112, %v527, 0
  %v585 = vsel %vm112, %v528, 0
  %v588 = vsel %vm112, %v529, 0
  %v591 = vsel %vm112, %v530, 0
  %v594 = vsel %vm112, %v531, 0
  %v597 = vsel %vm112, %v532, 0
  %v600 = vsel %vm112, %v533, 0
  %v603 = vsel %vm112, %v534, 0
  %v606 = vsel %vm112, %v535, 0
  %v609 = vsel %vm112, %v536, 0
  %v612 = vsel %vm112, %v537, 0
  %v615 = vsel %vm112, %v538, 0
  %v618 = vsel %vm112, %v539, 0
  %620 = vmatprep.subr.mxu0 0.0
  %621 = vmatpush1.msra.mxu0 %v88
  %622 = vmatprep.subr.mxu0 0.0
  %623 = vmatpush1.msra.mxu0 %v89
  %624 = vmatprep.subr.mxu0 0.0
  %625 = vmatpush1.msra.mxu0 %v90
  %626 = vmatprep.subr.mxu0 0.0
  %627 = vmatpush1.msra.mxu0 %v91
  %628 = vmatprep.subr.mxu0 0.0
  %629 = vmatpush1.msra.mxu0 %v92
  %630 = vmatprep.subr.mxu0 0.0
  %631 = vmatpush1.msra.mxu0 %v93
  %632 = vmatprep.subr.mxu0 0.0
  %633 = vmatpush1.msra.mxu0 %v94
  %634 = vmatprep.subr.mxu0 0.0
  %635 = vmatpush1.msra.mxu0 %v95
  %636 = vmatprep.subr.mxu0 0.0
  %637 = vmatpush1.msra.mxu0 0.0
  %638 = vmatprep.subr.mxu0 0.0
  %639 = vmatpush1.msra.mxu0 0.0
  %640 = vmatprep.subr.mxu0 0.0
  %641 = vmatpush1.msra.mxu0 0.0
  %642 = vmatprep.subr.mxu0 0.0
  %643 = vmatpush1.msra.mxu0 0.0
  %644 = vmatprep.subr.mxu0 0.0
  %645 = vmatpush1.msra.mxu0 0.0
  %646 = vmatprep.subr.mxu0 0.0
  %647 = vmatpush1.msra.mxu0 0.0
  %648 = vmatprep.subr.mxu0 0.0
  %649 = vmatpush1.msra.mxu0 0.0
  %650 = vmatprep.subr.mxu0 0.0
  %651 = vmatpush1.msra.mxu0 0.0
  %652 = vmatprep.subr.mxu0 0.0
  %653 = vmatpush1.msra.mxu0 0.0
  %654 = vmatprep.subr.mxu0 0.0
  %655 = vmatpush1.msra.mxu0 0.0
  %656 = vmatprep.subr.mxu0 0.0
  %657 = vmatpush1.msra.mxu0 0.0
  %658 = vmatprep.subr.mxu0 0.0
  %659 = vmatpush1.msra.mxu0 0.0
  %660 = vmatprep.subr.mxu0 0.0
  %661 = vmatpush1.msra.mxu0 0.0
  %662 = vmatprep.subr.mxu0 0.0
  %663 = vmatpush1.msra.mxu0 0.0
  %664 = vmatprep.subr.mxu0 0.0
  %665 = vmatpush1.msra.mxu0 0.0
  %666 = vmatprep.subr.mxu0 0.0
  %667 = vmatpush1.msra.mxu0 0.0
  %668 = vmatprep.subr.mxu0 0.0
  %669 = vmatpush1.msra.mxu0 0.0
  %670 = vmatprep.subr.mxu0 0.0
  %671 = vmatpush1.msra.mxu0 0.0
  %672 = vmatprep.subr.mxu0 0.0
  %673 = vmatpush1.msra.mxu0 0.0
  %674 = vmatprep.subr.mxu0 0.0
  %675 = vmatpush1.msra.mxu0 0.0
  %676 = vmatprep.subr.mxu0 0.0
  %677 = vmatpush1.msra.mxu0 0.0
  %678 = vmatprep.subr.mxu0 0.0
  %679 = vmatpush1.msra.mxu0 0.0
  %680 = vmatprep.subr.mxu0 0.0
  %681 = vmatpush1.msra.mxu0 0.0
  %682 = vmatprep.subr.mxu0 0.0
  %683 = vmatpush1.msra.mxu0 0.0
  %684 = vmatprep.mubr.f32.mxu0 0.0
  %685 = vmatmul.mubr.f32.gmra.mrb[0].mxu0 %v573
  %v686 = vpop.f32.mrb[0].mxu0
  %v687 = vadd.f32 1e-16, %v686
  %v688 = vpop.f32.mrb[0].mxu0
  %689 = vmatprep.mubr.f32.mxu0 0.0
  %690 = vmatmul.mubr.f32.gmra.mrb[0].mxu0 %v576
  %v691 = vpop.f32.mrb[0].mxu0
  %v692 = vadd.f32 1e-16, %v691
  %v693 = vpop.f32.mrb[0].mxu0
  %694 = vmatprep.mubr.f32.mxu0 0.0
  %695 = vmatmul.mubr.f32.gmra.mrb[0].mxu0 %v579
  %v696 = vpop.f32.mrb[0].mxu0
  %v697 = vadd.f32 1e-16, %v696
  %v698 = vpop.f32.mrb[0].mxu0
  %699 = vmatprep.mubr.f32.mxu0 0.0
  %700 = vmatmul.mubr.f32.gmra.mrb[0].mxu0 %v582
  %v701 = vpop.f32.mrb[0].mxu0
  %v702 = vadd.f32 1e-16, %v701
  %v703 = vpop.f32.mrb[0].mxu0
  %704 = vmatprep.mubr.f32.mxu0 0.0
  %705 = vmatmul.mubr.f32.gmra.mrb[0].mxu0 %v585
  %v706 = vpop.f32.mrb[0].mxu0
  %v707 = vadd.f32 1e-16, %v706
  %v708 = vpop.f32.mrb[0].mxu0
  %709 = vmatprep.mubr.f32.mxu0 0.0
  %710 = vmatmul.mubr.f32.gmra.mrb[0].mxu0 %v588
  %v711 = vpop.f32.mrb[0].mxu0
  %v712 = vadd.f32 1e-16, %v711
  %v713 = vpop.f32.mrb[0].mxu0
  %714 = vmatprep.mubr.f32.mxu0 0.0
  %715 = vmatmul.mubr.f32.gmra.mrb[0].mxu0 %v591
  %v716 = vpop.f32.mrb[0].mxu0
  %v717 = vadd.f32 1e-16, %v716
  %v718 = vpop.f32.mrb[0].mxu0
  %719 = vmatprep.mubr.f32.mxu0 0.0
  %720 = vmatmul.mubr.f32.gmra.mrb[0].mxu0 %v594
  %v721 = vpop.f32.mrb[0].mxu0
  %v722 = vadd.f32 1e-16, %v721
  %v723 = vpop.f32.mrb[0].mxu0
  %724 = vmatprep.mubr.f32.mxu0 0.0
  %725 = vmatmul.mubr.f32.gmra.mrb[0].mxu0 %v597
  %v726 = vpop.f32.mrb[0].mxu0
  %v727 = vadd.f32 1e-16, %v726
  %v728 = vpop.f32.mrb[0].mxu0
  %729 = vmatprep.mubr.f32.mxu0 0.0
  %730 = vmatmul.mubr.f32.gmra.mrb[0].mxu0 %v600
  %v731 = vpop.f32.mrb[0].mxu0
  %v732 = vadd.f32 1e-16, %v731
  %v733 = vpop.f32.mrb[0].mxu0
  %734 = vmatprep.mubr.f32.mxu0 0.0
  %735 = vmatmul.mubr.f32.gmra.mrb[0].mxu0 %v603
  %v736 = vpop.f32.mrb[0].mxu0
  %v737 = vadd.f32 1e-16, %v736
  %v738 = vpop.f32.mrb[0].mxu0
  %739 = vmatprep.mubr.f32.mxu0 0.0
  %740 = vmatmul.mubr.f32.gmra.mrb[0].mxu0 %v606
  %v741 = vpop.f32.mrb[0].mxu0
  %v742 = vadd.f32 1e-16, %v741
  %v743 = vpop.f32.mrb[0].mxu0
  %744 = vmatprep.mubr.f32.mxu0 0.0
  %745 = vmatmul.mubr.f32.gmra.mrb[0].mxu0 %v609
  %v746 = vpop.f32.mrb[0].mxu0
  %v747 = vadd.f32 1e-16, %v746
  %v748 = vpop.f32.mrb[0].mxu0
  %749 = vmatprep.mubr.f32.mxu0 0.0
  %750 = vmatmul.mubr.f32.gmra.mrb[0].mxu0 %v612
  %v751 = vpop.f32.mrb[0].mxu0
  %v752 = vadd.f32 1e-16, %v751
  %v753 = vpop.f32.mrb[0].mxu0
  %754 = vmatprep.mubr.f32.mxu0 0.0
  %755 = vmatmul.mubr.f32.gmra.mrb[0].mxu0 %v615
  %v756 = vpop.f32.mrb[0].mxu0
  %v757 = vadd.f32 1e-16, %v756
  %v758 = vpop.f32.mrb[0].mxu0
  %759 = vmatprep.mubr.f32.mxu0 0.0
  %760 = vmatmul.mubr.f32.gmra.mrb[0].mxu0 %v618
  %v761 = vpop.f32.mrb[0].mxu0
  %v762 = vadd.f32 1e-16, %v761
  %v763 = vpop.f32.mrb[0].mxu0
  %764 = vdwg.mxu0
  %v765 = vrcp.pop %v687
  %v766 = vmul.f32 %v556, %v765
  %v767 = vrcp.pop %v692
  %v768 = vmul.f32 %v557, %v767
  %v769 = vrcp.pop %v697
  %v770 = vmul.f32 %v558, %v769
  %v771 = vrcp.pop %v702
  %v772 = vmul.f32 %v559, %v771
  %v773 = vrcp.pop %v707
  %v774 = vmul.f32 %v560, %v773
  %v775 = vrcp.pop %v712
  %v776 = vmul.f32 %v561, %v775
  %v777 = vrcp.pop %v717
  %v778 = vmul.f32 %v562, %v777
  %v779 = vrcp.pop %v722
  %v780 = vmul.f32 %v563, %v779
  %v781 = vrcp.pop %v727
  %v782 = vmul.f32 %v564, %v781
  %v783 = vrcp.pop %v732
  %v784 = vmul.f32 %v565, %v783
  %v785 = vrcp.pop %v737
  %v786 = vmul.f32 %v566, %v785
  %v787 = vrcp.pop %v742
  %v788 = vmul.f32 %v567, %v787
  %v789 = vrcp.pop %v747
  %v790 = vmul.f32 %v568, %v789
  %v791 = vrcp.pop %v752
  %v792 = vmul.f32 %v569, %v791
  %v793 = vrcp.pop %v757
  %v794 = vmul.f32 %v570, %v793
  %v795 = vrcp.pop %v762
  %v796 = vmul.f32 %v571, %v795
  %797 = vst.msk [vmem:[%s4] sm:$0xff] %vm306, %v766
  %798 = vst.msk [vmem:[%s4 + $0x8] sm:$0xff] %vm306, %v768
  %799 = vst.msk [vmem:[%s4 + $0x10] sm:$0xff] %vm306, %v770
  %800 = vst.msk [vmem:[%s4 + $0x18] sm:$0xff] %vm306, %v772
  %801 = vst.msk [vmem:[%s4 + $0x20] sm:$0xff] %vm306, %v774
  %802 = vst.msk [vmem:[%s4 + $0x28] sm:$0xff] %vm306, %v776
  %803 = vst.msk [vmem:[%s4 + $0x30] sm:$0xff] %vm306, %v778
  %804 = vst.msk [vmem:[%s4 + $0x38] sm:$0xff] %vm306, %v780
  %805 = vst.msk [vmem:[%s4 + $0x40] sm:$0xff] %vm306, %v782
  %806 = vst.msk [vmem:[%s4 + $0x48] sm:$0xff] %vm306, %v784
  %807 = vst.msk [vmem:[%s4 + $0x50] sm:$0xff] %vm306, %v786
  %808 = vst.msk [vmem:[%s4 + $0x58] sm:$0xff] %vm306, %v788
  %809 = vst.msk [vmem:[%s4 + $0x60] sm:$0xff] %vm306, %v790
  %810 = vst.msk [vmem:[%s4 + $0x68] sm:$0xff] %vm306, %v792
  %811 = vst.msk [vmem:[%s4 + $0x70] sm:$0xff] %vm306, %v794
  %812 = vst.msk [vmem:[%s4 + $0x78] sm:$0xff] %vm306, %v796
  %v813 = vld [vmem:[#allocation2] sm:$0xff]
  %v814 = vld [vmem:[#allocation2 + $0x8] sm:$0xff]
  %v815 = vld [vmem:[#allocation2 + $0x10] sm:$0xff]
  %v816 = vld [vmem:[#allocation2 + $0x18] sm:$0xff]
  %v817 = vld [vmem:[#allocation2 + $0x20] sm:$0xff]
  %v818 = vld [vmem:[#allocation2 + $0x28] sm:$0xff]
  %v819 = vld [vmem:[#allocation2 + $0x30] sm:$0xff]
  %v820 = vld [vmem:[#allocation2 + $0x38] sm:$0xff]
  %821 = vxpose.xlu0.b32.start [1/16] %v96, 128
  %822 = vxpose.xlu0.b32.cont [2/16] %v97, 128
  %823 = vxpose.xlu0.b32.cont [3/16] %v98, 128
  %824 = vxpose.xlu0.b32.cont [4/16] %v99, 128
  %825 = vxpose.xlu0.b32.cont [5/16] %v100, 128
  %826 = vxpose.xlu0.b32.cont [6/16] %v101, 128
  %827 = vxpose.xlu0.b32.cont [7/16] %v102, 128
  %828 = vxpose.xlu0.b32.cont [8/16] %v103, 128
  %829 = vxpose.xlu0.b32.cont [9/16] %v104, 128
  %830 = vxpose.xlu0.b32.cont [10/16] %v105, 128
  %831 = vxpose.xlu0.b32.cont [11/16] %v106, 128
  %832 = vxpose.xlu0.b32.cont [12/16] %v107, 128
  %833 = vxpose.xlu0.b32.cont [13/16] %v108, 128
  %834 = vxpose.xlu0.b32.cont [14/16] %v109, 128
  %835 = vxpose.xlu0.b32.cont [15/16] %v110, 128
  %836 = vxpose.xlu0.b32.end [16/16] %v111, 128
  %v837 = vpop.trf.xlu0
  %v838 = vpop.trf.xlu0
  %v839 = vpop.trf.xlu0
  %v840 = vpop.trf.xlu0
  %v841 = vpop.trf.xlu0
  %v842 = vpop.trf.xlu0
  %v843 = vpop.trf.xlu0
  %v844 = vpop.trf.xlu0
  %v845 = vpop.trf.xlu0
  %v846 = vpop.trf.xlu0
  %v847 = vpop.trf.xlu0
  %v848 = vpop.trf.xlu0
  %v849 = vpop.trf.xlu0
  %v850 = vpop.trf.xlu0
  %v851 = vpop.trf.xlu0
  %v852 = vpop.trf.xlu0
  %853 = vmatprep.subr.mxu0 0.0
  %854 = vmatpush1.msra.mxu0 %v766
  %855 = vmatprep.subr.mxu0 0.0
  %856 = vmatpush1.msra.mxu0 %v768
  %857 = vmatprep.subr.mxu0 0.0
  %858 = vmatpush1.msra.mxu0 %v770
  %859 = vmatprep.subr.mxu0 0.0
  %860 = vmatpush1.msra.mxu0 %v772
  %861 = vmatprep.subr.mxu0 0.0
  %862 = vmatpush1.msra.mxu0 %v774
  %863 = vmatprep.subr.mxu0 0.0
  %864 = vmatpush1.msra.mxu0 %v776
  %865 = vmatprep.subr.mxu0 0.0
  %866 = vmatpush1.msra.mxu0 %v778
  %867 = vmatprep.subr.mxu0 0.0
  %868 = vmatpush1.msra.mxu0 %v780
  %869 = vmatprep.subr.mxu0 0.0
  %870 = vmatpush1.msra.mxu0 %v782
  %871 = vmatprep.subr.mxu0 0.0
  %872 = vmatpush1.msra.mxu0 %v784
  %873 = vmatprep.subr.mxu0 0.0
  %874 = vmatpush1.msra.mxu0 %v786
  %875 = vmatprep.subr.mxu0 0.0
  %876 = vmatpush1.msra.mxu0 %v788
  %877 = vmatprep.subr.mxu0 0.0
  %878 = vmatpush1.msra.mxu0 %v790
  %879 = vmatprep.subr.mxu0 0.0
  %880 = vmatpush1.msra.mxu0 %v792
  %881 = vmatprep.subr.mxu0 0.0
  %882 = vmatpush1.msra.mxu0 %v794
  %883 = vmatprep.subr.mxu0 0.0
  %884 = vmatpush1.msra.mxu0 %v796
  %885 = vmatprep.subr.mxu0 0.0
  %886 = vmatpush1.msra.mxu0 0.0
  %887 = vmatprep.subr.mxu0 0.0
  %888 = vmatpush1.msra.mxu0 0.0
  %889 = vmatprep.subr.mxu0 0.0
  %890 = vmatpush1.msra.mxu0 0.0
  %891 = vmatprep.subr.mxu0 0.0
  %892 = vmatpush1.msra.mxu0 0.0
  %893 = vmatprep.subr.mxu0 0.0
  %894 = vmatpush1.msra.mxu0 0.0
  %895 = vmatprep.subr.mxu0 0.0
  %896 = vmatpush1.msra.mxu0 0.0
  %897 = vmatprep.subr.mxu0 0.0
  %898 = vmatpush1.msra.mxu0 0.0
  %899 = vmatprep.subr.mxu0 0.0
  %900 = vmatpush1.msra.mxu0 0.0
  %901 = vmatprep.subr.mxu0 0.0
  %902 = vmatpush1.msra.mxu0 0.0
  %903 = vmatprep.subr.mxu0 0.0
  %904 = vmatpush1.msra.mxu0 0.0
  %905 = vmatprep.subr.mxu0 0.0
  %906 = vmatpush1.msra.mxu0 0.0
  %907 = vmatprep.subr.mxu0 0.0
  %908 = vmatpush1.msra.mxu0 0.0
  %909 = vmatprep.subr.mxu0 0.0
  %910 = vmatpush1.msra.mxu0 0.0
  %911 = vmatprep.subr.mxu0 0.0
  %912 = vmatpush1.msra.mxu0 0.0
  %913 = vmatprep.subr.mxu0 0.0
  %914 = vmatpush1.msra.mxu0 0.0
  %915 = vmatprep.subr.mxu0 0.0
  %916 = vmatpush1.msra.mxu0 0.0
  %917 = vmatprep.mubr.f32.mxu0 0.0
  %918 = vmatmul.mubr.f32.gmra.mrb[0].mxu0 %v837
  %v919 = vpop.f32.mrb[0].mxu0
  %v920 = vadd.f32 0.0, %v919
  %v921 = vpop.f32.mrb[0].mxu0
  %922 = vmatprep.mubr.f32.mxu0 0.0
  %923 = vmatmul.mubr.f32.gmra.mrb[0].mxu0 %v838
  %v924 = vpop.f32.mrb[0].mxu0
  %v925 = vadd.f32 0.0, %v924
  %v926 = vpop.f32.mrb[0].mxu0
  %927 = vmatprep.mubr.f32.mxu0 0.0
  %928 = vmatmul.mubr.f32.gmra.mrb[0].mxu0 %v839
  %v929 = vpop.f32.mrb[0].mxu0
  %v930 = vadd.f32 0.0, %v929
  %v931 = vpop.f32.mrb[0].mxu0
  %932 = vmatprep.mubr.f32.mxu0 0.0
  %933 = vmatmul.mubr.f32.gmra.mrb[0].mxu0 %v840
  %v934 = vpop.f32.mrb[0].mxu0
  %v935 = vadd.f32 0.0, %v934
  %v936 = vpop.f32.mrb[0].mxu0
  %937 = vmatprep.mubr.f32.mxu0 0.0
  %938 = vmatmul.mubr.f32.gmra.mrb[0].mxu0 %v841
  %v939 = vpop.f32.mrb[0].mxu0
  %v940 = vadd.f32 0.0, %v939
  %v941 = vpop.f32.mrb[0].mxu0
  %942 = vmatprep.mubr.f32.mxu0 0.0
  %943 = vmatmul.mubr.f32.gmra.mrb[0].mxu0 %v842
  %v944 = vpop.f32.mrb[0].mxu0
  %v945 = vadd.f32 0.0, %v944
  %v946 = vpop.f32.mrb[0].mxu0
  %947 = vmatprep.mubr.f32.mxu0 0.0
  %948 = vmatmul.mubr.f32.gmra.mrb[0].mxu0 %v843
  %v949 = vpop.f32.mrb[0].mxu0
  %v950 = vadd.f32 0.0, %v949
  %v951 = vpop.f32.mrb[0].mxu0
  %952 = vmatprep.mubr.f32.mxu0 0.0
  %953 = vmatmul.mubr.f32.gmra.mrb[0].mxu0 %v844
  %v954 = vpop.f32.mrb[0].mxu0
  %v955 = vadd.f32 0.0, %v954
  %v956 = vpop.f32.mrb[0].mxu0
  %957 = vdwg.mxu0
  %v958 = vadd.f32 %v813, %v920
  %v959 = vadd.f32 %v814, %v925
  %v960 = vadd.f32 %v815, %v930
  %v961 = vadd.f32 %v816, %v935
  %v962 = vadd.f32 %v817, %v940
  %v963 = vadd.f32 %v818, %v945
  %v964 = vadd.f32 %v819, %v950
  %v965 = vadd.f32 %v820, %v955
  %966 = vst.msk [vmem:[#allocation2] sm:$0xff] %vm306, %v958
  %967 = vst.msk [vmem:[#allocation2 + $0x8] sm:$0xff] %vm306, %v959
  %968 = vst.msk [vmem:[#allocation2 + $0x10] sm:$0xff] %vm306, %v960
  %969 = vst.msk [vmem:[#allocation2 + $0x18] sm:$0xff] %vm306, %v961
  %970 = vst.msk [vmem:[#allocation2 + $0x20] sm:$0xff] %vm306, %v962
  %971 = vst.msk [vmem:[#allocation2 + $0x28] sm:$0xff] %vm306, %v963
  %972 = vst.msk [vmem:[#allocation2 + $0x30] sm:$0xff] %vm306, %v964
  %973 = vst.msk [vmem:[#allocation2 + $0x38] sm:$0xff] %vm306, %v965
  %v975 = vsel %vm306, %v766, 0
  %v978 = vsel %vm306, %v768, 0
  %v981 = vsel %vm306, %v770, 0
  %v984 = vsel %vm306, %v772, 0
  %v987 = vsel %vm306, %v774, 0
  %v990 = vsel %vm306, %v776, 0
  %v993 = vsel %vm306, %v778, 0
  %v996 = vsel %vm306, %v780, 0
  %v999 = vsel %vm306, %v782, 0
  %v1002 = vsel %vm306, %v784, 0
  %v1005 = vsel %vm306, %v786, 0
  %v1008 = vsel %vm306, %v788, 0
  %v1011 = vsel %vm306, %v790, 0
  %v1014 = vsel %vm306, %v792, 0
  %v1017 = vsel %vm306, %v794, 0
  %v1020 = vsel %vm306, %v796, 0
  %1022 = vmatprep.subr.mxu0 0.0
  %1023 = vmatpush1.xpose.msra.mxu0 %v356
  %1024 = vmatprep.subr.mxu0 0.0
  %1025 = vmatpush1.xpose.msra.mxu0 %v359
  %1026 = vmatprep.subr.mxu0 0.0
  %1027 = vmatpush1.xpose.msra.mxu0 %v362
  %1028 = vmatprep.subr.mxu0 0.0
  %1029 = vmatpush1.xpose.msra.mxu0 %v365
  %1030 = vmatprep.subr.mxu0 0.0
  %1031 = vmatpush1.xpose.msra.mxu0 %v368
  %1032 = vmatprep.subr.mxu0 0.0
  %1033 = vmatpush1.xpose.msra.mxu0 %v371
  %1034 = vmatprep.subr.mxu0 0.0
  %1035 = vmatpush1.xpose.msra.mxu0 %v374
  %1036 = vmatprep.subr.mxu0 0.0
  %1037 = vmatpush1.xpose.msra.mxu0 %v377
  %1038 = vmatprep.subr.mxu0 0.0
  %1039 = vmatpush1.xpose.msra.mxu0 0.0
  %1040 = vmatprep.subr.mxu0 0.0
  %1041 = vmatpush1.xpose.msra.mxu0 0.0
  %1042 = vmatprep.subr.mxu0 0.0
  %1043 = vmatpush1.xpose.msra.mxu0 0.0
  %1044 = vmatprep.subr.mxu0 0.0
  %1045 = vmatpush1.xpose.msra.mxu0 0.0
  %1046 = vmatprep.subr.mxu0 0.0
  %1047 = vmatpush1.xpose.msra.mxu0 0.0
  %1048 = vmatprep.subr.mxu0 0.0
  %1049 = vmatpush1.xpose.msra.mxu0 0.0
  %1050 = vmatprep.subr.mxu0 0.0
  %1051 = vmatpush1.xpose.msra.mxu0 0.0
  %1052 = vmatprep.subr.mxu0 0.0
  %1053 = vmatpush1.xpose.msra.mxu0 0.0
  %1054 = vmatprep.subr.mxu0 0.0
  %1055 = vmatpush1.xpose.msra.mxu0 0.0
  %1056 = vmatprep.subr.mxu0 0.0
  %1057 = vmatpush1.xpose.msra.mxu0 0.0
  %1058 = vmatprep.subr.mxu0 0.0
  %1059 = vmatpush1.xpose.msra.mxu0 0.0
  %1060 = vmatprep.subr.mxu0 0.0
  %1061 = vmatpush1.xpose.msra.mxu0 0.0
  %1062 = vmatprep.subr.mxu0 0.0
  %1063 = vmatpush1.xpose.msra.mxu0 0.0
  %1064 = vmatprep.subr.mxu0 0.0
  %1065 = vmatpush1.xpose.msra.mxu0 0.0
  %1066 = vmatprep.subr.mxu0 0.0
  %1067 = vmatpush1.xpose.msra.mxu0 0.0
  %1068 = vmatprep.subr.mxu0 0.0
  %1069 = vmatpush1.xpose.msra.mxu0 0.0
  %1070 = vmatprep.subr.mxu0 0.0
  %1071 = vmatpush1.xpose.msra.mxu0 0.0
  %1072 = vmatprep.subr.mxu0 0.0
  %1073 = vmatpush1.xpose.msra.mxu0 0.0
  %1074 = vmatprep.subr.mxu0 0.0
  %1075 = vmatpush1.xpose.msra.mxu0 0.0
  %1076 = vmatprep.subr.mxu0 0.0
  %1077 = vmatpush1.xpose.msra.mxu0 0.0
  %1078 = vmatprep.subr.mxu0 0.0
  %1079 = vmatpush1.xpose.msra.mxu0 0.0
  %1080 = vmatprep.subr.mxu0 0.0
  %1081 = vmatpush1.xpose.msra.mxu0 0.0
  %1082 = vmatprep.subr.mxu0 0.0
  %1083 = vmatpush1.xpose.msra.mxu0 0.0
  %1084 = vmatprep.subr.mxu0 0.0
  %1085 = vmatpush1.xpose.msra.mxu0 0.0
  %1086 = vmatprep.mubr.f32.mxu0 0.0
  %1087 = vmatmul.mubr.f32.gmra.mrb[0].mxu0 %v975
  %v1088 = vpop.f32.mrb[0].mxu0
  %v1089 = vadd.f32 0.0, %v1088
  %v1090 = vpop.f32.mrb[0].mxu0
  %1091 = vmatprep.mubr.f32.mxu0 0.0
  %1092 = vmatmul.mubr.f32.gmra.mrb[0].mxu0 %v978
  %v1093 = vpop.f32.mrb[0].mxu0
  %v1094 = vadd.f32 0.0, %v1093
  %v1095 = vpop.f32.mrb[0].mxu0
  %1096 = vmatprep.mubr.f32.mxu0 0.0
  %1097 = vmatmul.mubr.f32.gmra.mrb[0].mxu0 %v981
  %v1098 = vpop.f32.mrb[0].mxu0
  %v1099 = vadd.f32 0.0, %v1098
  %v1100 = vpop.f32.mrb[0].mxu0
  %1101 = vmatprep.mubr.f32.mxu0 0.0
  %1102 = vmatmul.mubr.f32.gmra.mrb[0].mxu0 %v984
  %v1103 = vpop.f32.mrb[0].mxu0
  %v1104 = vadd.f32 0.0, %v1103
  %v1105 = vpop.f32.mrb[0].mxu0
  %1106 = vmatprep.mubr.f32.mxu0 0.0
  %1107 = vmatmul.mubr.f32.gmra.mrb[0].mxu0 %v987
  %v1108 = vpop.f32.mrb[0].mxu0
  %v1109 = vadd.f32 0.0, %v1108
  %v1110 = vpop.f32.mrb[0].mxu0
  %1111 = vmatprep.mubr.f32.mxu0 0.0
  %1112 = vmatmul.mubr.f32.gmra.mrb[0].mxu0 %v990
  %v1113 = vpop.f32.mrb[0].mxu0
  %v1114 = vadd.f32 0.0, %v1113
  %v1115 = vpop.f32.mrb[0].mxu0
  %1116 = vmatprep.mubr.f32.mxu0 0.0
  %1117 = vmatmul.mubr.f32.gmra.mrb[0].mxu0 %v993
  %v1118 = vpop.f32.mrb[0].mxu0
  %v1119 = vadd.f32 0.0, %v1118
  %v1120 = vpop.f32.mrb[0].mxu0
  %1121 = vmatprep.mubr.f32.mxu0 0.0
  %1122 = vmatmul.mubr.f32.gmra.mrb[0].mxu0 %v996
  %v1123 = vpop.f32.mrb[0].mxu0
  %v1124 = vadd.f32 0.0, %v1123
  %v1125 = vpop.f32.mrb[0].mxu0
  %1126 = vmatprep.mubr.f32.mxu0 0.0
  %1127 = vmatmul.mubr.f32.gmra.mrb[0].mxu0 %v999
  %v1128 = vpop.f32.mrb[0].mxu0
  %v1129 = vadd.f32 0.0, %v1128
  %v1130 = vpop.f32.mrb[0].mxu0
  %1131 = vmatprep.mubr.f32.mxu0 0.0
  %1132 = vmatmul.mubr.f32.gmra.mrb[0].mxu0 %v1002
  %v1133 = vpop.f32.mrb[0].mxu0
  %v1134 = vadd.f32 0.0, %v1133
  %v1135 = vpop.f32.mrb[0].mxu0
  %1136 = vmatprep.mubr.f32.mxu0 0.0
  %1137 = vmatmul.mubr.f32.gmra.mrb[0].mxu0 %v1005
  %v1138 = vpop.f32.mrb[0].mxu0
  %v1139 = vadd.f32 0.0, %v1138
  %v1140 = vpop.f32.mrb[0].mxu0
  %1141 = vmatprep.mubr.f32.mxu0 0.0
  %1142 = vmatmul.mubr.f32.gmra.mrb[0].mxu0 %v1008
  %v1143 = vpop.f32.mrb[0].mxu0
  %v1144 = vadd.f32 0.0, %v1143
  %v1145 = vpop.f32.mrb[0].mxu0
  %1146 = vmatprep.mubr.f32.mxu0 0.0
  %1147 = vmatmul.mubr.f32.gmra.mrb[0].mxu0 %v1011
  %v1148 = vpop.f32.mrb[0].mxu0
  %v1149 = vadd.f32 0.0, %v1148
  %v1150 = vpop.f32.mrb[0].mxu0
  %1151 = vmatprep.mubr.f32.mxu0 0.0
  %1152 = vmatmul.mubr.f32.gmra.mrb[0].mxu0 %v1014
  %v1153 = vpop.f32.mrb[0].mxu0
  %v1154 = vadd.f32 0.0, %v1153
  %v1155 = vpop.f32.mrb[0].mxu0
  %1156 = vmatprep.mubr.f32.mxu0 0.0
  %1157 = vmatmul.mubr.f32.gmra.mrb[0].mxu0 %v1017
  %v1158 = vpop.f32.mrb[0].mxu0
  %v1159 = vadd.f32 0.0, %v1158
  %v1160 = vpop.f32.mrb[0].mxu0
  %1161 = vmatprep.mubr.f32.mxu0 0.0
  %1162 = vmatmul.mubr.f32.gmra.mrb[0].mxu0 %v1020
  %v1163 = vpop.f32.mrb[0].mxu0
  %v1164 = vadd.f32 0.0, %v1163
  %v1165 = vpop.f32.mrb[0].mxu0
  %1166 = vdwg.mxu0
  %v1167 = vld [vmem:[#allocation3] sm:$0xff]
  %v1168 = vld [vmem:[#allocation3 + $0x8] sm:$0xff]
  %v1169 = vld [vmem:[#allocation3 + $0x10] sm:$0xff]
  %v1170 = vld [vmem:[#allocation3 + $0x18] sm:$0xff]
  %v1171 = vld [vmem:[#allocation3 + $0x20] sm:$0xff]
  %v1172 = vld [vmem:[#allocation3 + $0x28] sm:$0xff]
  %v1173 = vld [vmem:[#allocation3 + $0x30] sm:$0xff]
  %v1174 = vld [vmem:[#allocation3 + $0x38] sm:$0xff]
  %v1175 = vmul.f32 %v56, %v1089
  %v1176 = vmul.f32 %v57, %v1094
  %v1177 = vmul.f32 %v58, %v1099
  %v1178 = vmul.f32 %v59, %v1104
  %v1179 = vmul.f32 %v60, %v1109
  %v1180 = vmul.f32 %v61, %v1114
  %v1181 = vmul.f32 %v62, %v1119
  %v1182 = vmul.f32 %v63, %v1124
  %v1183 = vmul.f32 %v64, %v1129
  %v1184 = vmul.f32 %v65, %v1134
  %v1185 = vmul.f32 %v66, %v1139
  %v1186 = vmul.f32 %v67, %v1144
  %v1187 = vmul.f32 %v68, %v1149
  %v1188 = vmul.f32 %v69, %v1154
  %v1189 = vmul.f32 %v70, %v1159
  %v1190 = vmul.f32 %v71, %v1164
  %1191 = vxpose.xlu0.b32.start [1/16] %v1175, 128
  %1192 = vxpose.xlu0.b32.cont [2/16] %v1176, 128
  %1193 = vxpose.xlu0.b32.cont [3/16] %v1177, 128
  %1194 = vxpose.xlu0.b32.cont [4/16] %v1178, 128
  %1195 = vxpose.xlu0.b32.cont [5/16] %v1179, 128
  %1196 = vxpose.xlu0.b32.cont [6/16] %v1180, 128
  %1197 = vxpose.xlu0.b32.cont [7/16] %v1181, 128
  %1198 = vxpose.xlu0.b32.cont [8/16] %v1182, 128
  %1199 = vxpose.xlu0.b32.cont [9/16] %v1183, 128
  %1200 = vxpose.xlu0.b32.cont [10/16] %v1184, 128
  %1201 = vxpose.xlu0.b32.cont [11/16] %v1185, 128
  %1202 = vxpose.xlu0.b32.cont [12/16] %v1186, 128
  %1203 = vxpose.xlu0.b32.cont [13/16] %v1187, 128
  %1204 = vxpose.xlu0.b32.cont [14/16] %v1188, 128
  %1205 = vxpose.xlu0.b32.cont [15/16] %v1189, 128
  %1206 = vxpose.xlu0.b32.end [16/16] %v1190, 128
  %v1207 = vpop.trf.xlu0
  %v1208 = vpop.trf.xlu0
  %v1209 = vpop.trf.xlu0
  %v1210 = vpop.trf.xlu0
  %v1211 = vpop.trf.xlu0
  %v1212 = vpop.trf.xlu0
  %v1213 = vpop.trf.xlu0
  %v1214 = vpop.trf.xlu0
  %v1215 = vpop.trf.xlu0
  %v1216 = vpop.trf.xlu0
  %v1217 = vpop.trf.xlu0
  %v1218 = vpop.trf.xlu0
  %v1219 = vpop.trf.xlu0
  %v1220 = vpop.trf.xlu0
  %v1221 = vpop.trf.xlu0
  %v1222 = vpop.trf.xlu0
  %1223 = vmatprep.subr.mxu0 0.0
  %1224 = vmatpush1.msra.mxu0 %v766
  %1225 = vmatprep.subr.mxu0 0.0
  %1226 = vmatpush1.msra.mxu0 %v768
  %1227 = vmatprep.subr.mxu0 0.0
  %1228 = vmatpush1.msra.mxu0 %v770
  %1229 = vmatprep.subr.mxu0 0.0
  %1230 = vmatpush1.msra.mxu0 %v772
  %1231 = vmatprep.subr.mxu0 0.0
  %1232 = vmatpush1.msra.mxu0 %v774
  %1233 = vmatprep.subr.mxu0 0.0
  %1234 = vmatpush1.msra.mxu0 %v776
  %1235 = vmatprep.subr.mxu0 0.0
  %1236 = vmatpush1.msra.mxu0 %v778
  %1237 = vmatprep.subr.mxu0 0.0
  %1238 = vmatpush1.msra.mxu0 %v780
  %1239 = vmatprep.subr.mxu0 0.0
  %1240 = vmatpush1.msra.mxu0 %v782
  %1241 = vmatprep.subr.mxu0 0.0
  %1242 = vmatpush1.msra.mxu0 %v784
  %1243 = vmatprep.subr.mxu0 0.0
  %1244 = vmatpush1.msra.mxu0 %v786
  %1245 = vmatprep.subr.mxu0 0.0
  %1246 = vmatpush1.msra.mxu0 %v788
  %1247 = vmatprep.subr.mxu0 0.0
  %1248 = vmatpush1.msra.mxu0 %v790
  %1249 = vmatprep.subr.mxu0 0.0
  %1250 = vmatpush1.msra.mxu0 %v792
  %1251 = vmatprep.subr.mxu0 0.0
  %1252 = vmatpush1.msra.mxu0 %v794
  %1253 = vmatprep.subr.mxu0 0.0
  %1254 = vmatpush1.msra.mxu0 %v796
  %1255 = vmatprep.subr.mxu0 0.0
  %1256 = vmatpush1.msra.mxu0 0.0
  %1257 = vmatprep.subr.mxu0 0.0
  %1258 = vmatpush1.msra.mxu0 0.0
  %1259 = vmatprep.subr.mxu0 0.0
  %1260 = vmatpush1.msra.mxu0 0.0
  %1261 = vmatprep.subr.mxu0 0.0
  %1262 = vmatpush1.msra.mxu0 0.0
  %1263 = vmatprep.subr.mxu0 0.0
  %1264 = vmatpush1.msra.mxu0 0.0
  %1265 = vmatprep.subr.mxu0 0.0
  %1266 = vmatpush1.msra.mxu0 0.0
  %1267 = vmatprep.subr.mxu0 0.0
  %1268 = vmatpush1.msra.mxu0 0.0
  %1269 = vmatprep.subr.mxu0 0.0
  %1270 = vmatpush1.msra.mxu0 0.0
  %1271 = vmatprep.subr.mxu0 0.0
  %1272 = vmatpush1.msra.mxu0 0.0
  %1273 = vmatprep.subr.mxu0 0.0
  %1274 = vmatpush1.msra.mxu0 0.0
  %1275 = vmatprep.subr.mxu0 0.0
  %1276 = vmatpush1.msra.mxu0 0.0
  %1277 = vmatprep.subr.mxu0 0.0
  %1278 = vmatpush1.msra.mxu0 0.0
  %1279 = vmatprep.subr.mxu0 0.0
  %1280 = vmatpush1.msra.mxu0 0.0
  %1281 = vmatprep.subr.mxu0 0.0
  %1282 = vmatpush1.msra.mxu0 0.0
  %1283 = vmatprep.subr.mxu0 0.0
  %1284 = vmatpush1.msra.mxu0 0.0
  %1285 = vmatprep.subr.mxu0 0.0
  %1286 = vmatpush1.msra.mxu0 0.0
  %1287 = vmatprep.mubr.f32.mxu0 0.0
  %1288 = vmatmul.mubr.f32.gmra.mrb[0].mxu0 %v1207
  %v1289 = vpop.f32.mrb[0].mxu0
  %v1290 = vadd.f32 0.0, %v1289
  %v1291 = vpop.f32.mrb[0].mxu0
  %1292 = vmatprep.mubr.f32.mxu0 0.0
  %1293 = vmatmul.mubr.f32.gmra.mrb[0].mxu0 %v1208
  %v1294 = vpop.f32.mrb[0].mxu0
  %v1295 = vadd.f32 0.0, %v1294
  %v1296 = vpop.f32.mrb[0].mxu0
  %1297 = vmatprep.mubr.f32.mxu0 0.0
  %1298 = vmatmul.mubr.f32.gmra.mrb[0].mxu0 %v1209
  %v1299 = vpop.f32.mrb[0].mxu0
  %v1300 = vadd.f32 0.0, %v1299
  %v1301 = vpop.f32.mrb[0].mxu0
  %1302 = vmatprep.mubr.f32.mxu0 0.0
  %1303 = vmatmul.mubr.f32.gmra.mrb[0].mxu0 %v1210
  %v1304 = vpop.f32.mrb[0].mxu0
  %v1305 = vadd.f32 0.0, %v1304
  %v1306 = vpop.f32.mrb[0].mxu0
  %1307 = vmatprep.mubr.f32.mxu0 0.0
  %1308 = vmatmul.mubr.f32.gmra.mrb[0].mxu0 %v1211
  %v1309 = vpop.f32.mrb[0].mxu0
  %v1310 = vadd.f32 0.0, %v1309
  %v1311 = vpop.f32.mrb[0].mxu0
  %1312 = vmatprep.mubr.f32.mxu0 0.0
  %1313 = vmatmul.mubr.f32.gmra.mrb[0].mxu0 %v1212
  %v1314 = vpop.f32.mrb[0].mxu0
  %v1315 = vadd.f32 0.0, %v1314
  %v1316 = vpop.f32.mrb[0].mxu0
  %1317 = vmatprep.mubr.f32.mxu0 0.0
  %1318 = vmatmul.mubr.f32.gmra.mrb[0].mxu0 %v1213
  %v1319 = vpop.f32.mrb[0].mxu0
  %v1320 = vadd.f32 0.0, %v1319
  %v1321 = vpop.f32.mrb[0].mxu0
  %1322 = vmatprep.mubr.f32.mxu0 0.0
  %1323 = vmatmul.mubr.f32.gmra.mrb[0].mxu0 %v1214
  %v1324 = vpop.f32.mrb[0].mxu0
  %v1325 = vadd.f32 0.0, %v1324
  %v1326 = vpop.f32.mrb[0].mxu0
  %1327 = vdwg.mxu0
  %v1328 = vadd.f32 %v1167, %v1290
  %v1329 = vadd.f32 %v1168, %v1295
  %v1330 = vadd.f32 %v1169, %v1300
  %v1331 = vadd.f32 %v1170, %v1305
  %v1332 = vadd.f32 %v1171, %v1310
  %v1333 = vadd.f32 %v1172, %v1315
  %v1334 = vadd.f32 %v1173, %v1320
  %v1335 = vadd.f32 %v1174, %v1325
  %1336 = vst.msk [vmem:[#allocation3] sm:$0xff] %vm306, %v1328
  %1337 = vst.msk [vmem:[#allocation3 + $0x8] sm:$0xff] %vm306, %v1329
  %1338 = vst.msk [vmem:[#allocation3 + $0x10] sm:$0xff] %vm306, %v1330
  %1339 = vst.msk [vmem:[#allocation3 + $0x18] sm:$0xff] %vm306, %v1331
  %1340 = vst.msk [vmem:[#allocation3 + $0x20] sm:$0xff] %vm306, %v1332
  %1341 = vst.msk [vmem:[#allocation3 + $0x28] sm:$0xff] %vm306, %v1333
  %1342 = vst.msk [vmem:[#allocation3 + $0x30] sm:$0xff] %vm306, %v1334
  %1343 = vst.msk [vmem:[#allocation3 + $0x38] sm:$0xff] %vm306, %v1335
  // Predicated region
  $region22: #{tpu_custom_call.1} parent=0 // pred_check
    %p1344 = pneg %p19
  $region23: #{tpu_custom_call.1} parent=0 // pred_check_branch
    %1346 = sbr.rel (%p1344) target = $region25
  $region24: #{tpu_custom_call.1} parent=0 // pred_region
    %v1347 = vld [vmem:[#allocation2] sm:$0xff]
    %v1348 = vld [vmem:[#allocation2 + $0x8] sm:$0xff]
    %v1349 = vld [vmem:[#allocation2 + $0x10] sm:$0xff]
    %v1350 = vld [vmem:[#allocation2 + $0x18] sm:$0xff]
    %v1351 = vld [vmem:[#allocation2 + $0x20] sm:$0xff]
    %v1352 = vld [vmem:[#allocation2 + $0x28] sm:$0xff]
    %v1353 = vld [vmem:[#allocation2 + $0x30] sm:$0xff]
    %v1354 = vld [vmem:[#allocation2 + $0x38] sm:$0xff]
    %v1355 = vmul.f32 %v88, %v1347
    %v1356 = vmul.f32 %v89, %v1348
    %v1357 = vmul.f32 %v90, %v1349
    %v1358 = vmul.f32 %v91, %v1350
    %v1359 = vmul.f32 %v92, %v1351
    %v1360 = vmul.f32 %v93, %v1352
    %v1361 = vmul.f32 %v94, %v1353
    %v1362 = vmul.f32 %v95, %v1354
    %v1363 = vadd.f32 %v1355, 1e-16
    %v1364 = vadd.f32 %v1356, 1e-16
    %v1365 = vadd.f32 %v1357, 1e-16
    %v1366 = vadd.f32 %v1358, 1e-16
    %v1367 = vadd.f32 %v1359, 1e-16
    %v1368 = vadd.f32 %v1360, 1e-16
    %v1369 = vadd.f32 %v1361, 1e-16
    %v1370 = vadd.f32 %v1362, 1e-16
    %v1371 = vld [vmem:[#allocation3] sm:$0xff]
    %v1372 = vld [vmem:[#allocation3 + $0x8] sm:$0xff]
    %v1373 = vld [vmem:[#allocation3 + $0x10] sm:$0xff]
    %v1374 = vld [vmem:[#allocation3 + $0x18] sm:$0xff]
    %v1375 = vld [vmem:[#allocation3 + $0x20] sm:$0xff]
    %v1376 = vld [vmem:[#allocation3 + $0x28] sm:$0xff]
    %v1377 = vld [vmem:[#allocation3 + $0x30] sm:$0xff]
    %v1378 = vld [vmem:[#allocation3 + $0x38] sm:$0xff]
    %v1379 = vadd.f32 %v1371, 1e-16
    %v1380 = vadd.f32 %v1372, 1e-16
    %v1381 = vadd.f32 %v1373, 1e-16
    %v1382 = vadd.f32 %v1374, 1e-16
    %v1383 = vadd.f32 %v1375, 1e-16
    %v1384 = vadd.f32 %v1376, 1e-16
    %v1385 = vadd.f32 %v1377, 1e-16
    %v1386 = vadd.f32 %v1378, 1e-16
    %v1387 = vrcp.pop %v1379
    %v1388 = vmul.f32 %v1363, %v1387
    %v1389 = vrcp.pop %v1380
    %v1390 = vmul.f32 %v1364, %v1389
    %v1391 = vrcp.pop %v1381
    %v1392 = vmul.f32 %v1365, %v1391
    %v1393 = vrcp.pop %v1382
    %v1394 = vmul.f32 %v1366, %v1393
    %v1395 = vrcp.pop %v1383
    %v1396 = vmul.f32 %v1367, %v1395
    %v1397 = vrcp.pop %v1384
    %v1398 = vmul.f32 %v1368, %v1397
    %v1399 = vrcp.pop %v1385
    %v1400 = vmul.f32 %v1369, %v1399
    %v1401 = vrcp.pop %v1386
    %v1402 = vmul.f32 %v1370, %v1401
    %1403 = vst.msk [vmem:[%s5] sm:$0xff] %vm306, %v1388
    %1404 = vst.msk [vmem:[%s5 + $0x8] sm:$0xff] %vm306, %v1390
    %1405 = vst.msk [vmem:[%s5 + $0x10] sm:$0xff] %vm306, %v1392
    %1406 = vst.msk [vmem:[%s5 + $0x18] sm:$0xff] %vm306, %v1394
    %1407 = vst.msk [vmem:[%s5 + $0x20] sm:$0xff] %vm306, %v1396
    %1408 = vst.msk [vmem:[%s5 + $0x28] sm:$0xff] %vm306, %v1398
    %1409 = vst.msk [vmem:[%s5 + $0x30] sm:$0xff] %vm306, %v1400
    %1410 = vst.msk [vmem:[%s5 + $0x38] sm:$0xff] %vm306, %v1402
  $region25: #{tpu_custom_call.1} parent=0 // pred_fallthru
    _
  // Predicated region
  $region26: #{tpu_custom_call.1} parent=0 // pred_check
    _
  $region27: #{tpu_custom_call.1} parent=0 // pred_check_branch
    %1412 = sbr.rel (0) target = $region29
  $region28: #{tpu_custom_call.1} parent=0 // pred_region
    _
  $region29: #{tpu_custom_call.1} parent=0 // pred_fallthru
    _
  // Predicated region
  $region30: #{tpu_custom_call.1} parent=0 // pred_check
    _
  $region31: #{tpu_custom_call.1} parent=0 // pred_check_branch
    %1414 = sbr.rel (0) target = $region33
  $region32: #{tpu_custom_call.1} parent=0 // pred_region
    _
  $region33: #{tpu_custom_call.1} parent=0 // pred_fallthru
    _
  // Predicated region
  $region34: #{tpu_custom_call.1} parent=0 // pred_check
    _
  $region35: #{tpu_custom_call.1} parent=0 // pred_check_branch
    %1416 = sbr.rel (0) target = $region37
  $region36: #{tpu_custom_call.1} parent=0 // pred_region
    _
  $region37: #{tpu_custom_call.1} parent=0 // pred_fallthru
    _
  // Predicated region
  $region38: #{tpu_custom_call.1} parent=0 // pred_check
    _
  $region39: #{tpu_custom_call.1} parent=0 // pred_check_branch
    %1418 = sbr.rel (0) target = $region41
  $region40: #{tpu_custom_call.1} parent=0 // pred_region
    _
  $region41: #{tpu_custom_call.1} parent=0 // pred_fallthru
    _

</llo_original>
